<compile_context>
chip_gen: v6e
topology: v6e:2x2x1
jax: 0.10.0
libtpu: 0.0.40
codegen_flags: <defaults>
</compile_context>

<pallas_src>
import functools

import jax
import jax.numpy as jnp
from jax.experimental import pallas as pl
from jax.experimental.pallas import tpu as pltpu


def _conv3x3_kernel(x_ref, w_ref, o_ref, *, width, n_out):
    """One (batch, out-channel-tile) step of the 3x3 / stride-1 / pad-1 conv.

    x_ref: (C, (H+4)*W)  row-padded, flattened image (lane dim = flat spatial).
    w_ref: (9, TO, C)    per-tap weight matrices for this output-channel tile.
    o_ref: (TO, H*W)     lane-dense output tile (flattened spatial).
    """
    tile_o = o_ref.shape[0]

    # Output-column index of every lane; used to zero the wrapped-around
    # left/right boundary contributions of the kw=0 / kw=2 taps.  Built once
    # (VPU iota + mod) and shared by all six masked taps.
    col = jax.lax.broadcasted_iota(jnp.int32, (1, n_out), 1) % width
    not_first_col = col != 0
    not_last_col = col != (width - 1)

    acc = jnp.zeros((tile_o, n_out), jnp.float32)
    for kh in range(3):
        for kw in range(3):
            k = kh * 3 + kw
            # out pixel (h, w) reads padded row (h + kh + 1), column (w + kw - 1)
            # -> constant flat shift (kh+1)*W + (kw-1) on the flattened input.
            shift = (kh + 1) * width + (kw - 1)
            xs = x_ref[:, pl.ds(shift, n_out)]                    # (C, N) native dtype
            if kw == 0:      # left-neighbour tap: column 0 must see zero padding
                xs = jnp.where(not_first_col, xs, 0.0)
            elif kw == 2:    # right-neighbour tap: column W-1 must see zero padding
                xs = jnp.where(not_last_col, xs, 0.0)
            # MXU matmul in native operand dtype, f32 accumulation.
            acc = acc + jnp.dot(w_ref[k], xs,
                                preferred_element_type=jnp.float32)
    o_ref[...] = acc.astype(o_ref.dtype)


def _pick_out_tile(out_ch, n_spatial, batch, itemsize, vmem_budget_bytes=12 << 20):
    """Output-channel tile size.

    Must divide out_ch and be a multiple of 8 (or == out_ch).  Prefer the
    LARGEST tile whose double-buffered output block fits the VMEM budget
    (safe under v7x's 64 MiB / default 32 MiB scoped limit) while keeping at
    least 2 total grid steps (batch * channel-tiles) for pipelining /
    megacore sharding; at micro shapes bigger blocks beat more steps because
    the ~0.35 us per-step overhead dominates.
    """
    cands = [t for t in range(8, out_ch + 1, 8) if out_ch % t == 0]
    if not cands:
        cands = [out_ch]
    fitting = [t for t in cands if 2 * t * n_spatial * itemsize <= vmem_budget_bytes]
    if not fitting:
        return cands[0]
    good = [t for t in fitting if batch * (out_ch // t) >= 2]
    return max(good) if good else max(fitting)


def overlap_patch_embed(x, weight, bias=None):
    """3x3 conv, stride 1, padding 1.  x: (B, C, H, W) NCHW; weight: (O, C, 3, 3) OIHW."""
    b, c, h, w = x.shape
    o = weight.shape[0]
    assert weight.shape == (o, c, 3, 3), weight.shape

    n = h * w                      # flattened output spatial length (lane-dense)
    hp = h + 4                     # 2 zero rows top + 2 bottom (keeps shifted slices in-bounds)

    # Wrapper-side layout prep (cheap / free on HBM).
    xpad = jnp.pad(x, ((0, 0), (0, 0), (2, 2), (0, 0)))
    xflat = xpad.reshape(b, c, hp * w)                       # free metadata reshape
    wtaps = jnp.transpose(weight, (2, 3, 0, 1)).reshape(9, o, c)

    itemsize = jnp.dtype(x.dtype).itemsize
    to = _pick_out_tile(o, n, b, itemsize)

    kernel = functools.partial(_conv3x3_kernel, width=w, n_out=n)

    out_flat = pl.pallas_call(
        kernel,
        out_shape=jax.ShapeDtypeStruct((b, o, n), x.dtype),
        grid_spec=pltpu.PrefetchScalarGridSpec(
            num_scalar_prefetch=0,
            grid=(b, o // to),
            in_specs=[
                # Full flattened image per batch element; block index ignores the
                # channel-tile axis, so it stays VMEM-resident across the inner
                # (channel-tile) grid axis and is DMA'd once per batch element.
                pl.BlockSpec((pl.Squeezed(), c, hp * w), lambda bi, ti: (bi, 0, 0)),
                # Per-tap weights for the current output-channel tile (tiny).
                pl.BlockSpec((9, to, c), lambda bi, ti: (0, ti, 0)),
            ],
            out_specs=pl.BlockSpec((pl.Squeezed(), to, n), lambda bi, ti: (bi, ti, 0)),
        ),
        compiler_params=pltpu.CompilerParams(
            dimension_semantics=("parallel", "parallel"),
        ),
        cost_estimate=pl.CostEstimate(
            flops=2 * 9 * b * c * o * h * w,
            transcendentals=0,
            bytes_accessed=(xflat.size + wtaps.size + b * o * n) * itemsize,
        ),
    )(xflat, wtaps)

    out = out_flat.reshape(b, o, h, w)                       # free metadata reshape
    if bias is not None:                                      # module uses bias=False
        out = out + bias.reshape(1, o, 1, 1)
    return out


if __name__ == "__main__":
    key = jax.random.PRNGKey(0)
    kx, kw = jax.random.split(key)

    B, C, H, W = 2, 3, 16, 16       # in_c=3 (module default), small spatial
    EMBED = 48                      # embed_dim=48 (module default)

    x = jax.random.normal(kx, (B, C, H, W), dtype=jnp.float32)
    weight = 0.1 * jax.random.normal(kw, (EMBED, C, 3, 3), dtype=jnp.float32)

    out = overlap_patch_embed(x, weight)
    out = jax.block_until_ready(out)

    # Reference: exact PyTorch Conv2d(k=3, s=1, p=1, bias=False) semantics.
    ref = jax.lax.conv_general_dilated(
        x, weight, window_strides=(1, 1), padding=((1, 1), (1, 1)),
        dimension_numbers=("NCHW", "OIHW", "NCHW"),
        precision=jax.lax.Precision.HIGHEST)

    assert out.shape == (B, EMBED, H, W), out.shape
    assert out.dtype == x.dtype, out.dtype
    assert jnp.allclose(out, ref, atol=1e-3, rtol=1e-3), \
        float(jnp.max(jnp.abs(out - ref)))

    print("KERNEL_OK")
</pallas_src>

<mosaic_0001>
module attributes {stable_mosaic.version = 11 : i64} {
  func.func @_conv3x3_kernel(%arg0: i32, %arg1: i32, %arg2: memref<1x3x320xf32, #tpu.memory_space<vmem>>, %arg3: memref<9x48x3xf32, #tpu.memory_space<vmem>>, %arg4: memref<1x48x256xf32, #tpu.memory_space<vmem>>) attributes {dimension_semantics = [#tpu.dimension_semantics<parallel>, #tpu.dimension_semantics<parallel>], iteration_bounds = array<i64: 2, 1>, scalar_prefetch = 0 : i64, scratch_operands = 0 : i64, tpu.core_type = #tpu.core_type<tc>, window_params = [{transform_indices = @transform_0, window_bounds = array<i64: 1, 3, 320>}, {transform_indices = @transform_1, window_bounds = array<i64: 9, 48, 3>}, {transform_indices = @transform_2, window_bounds = array<i64: 1, 48, 256>}]} {
    %0 = tpu.iota {dimensions = array<i32: 1>} : vector<1x256xi32>
    %c16_i32 = arith.constant 16 : i32
    %c0_i32 = arith.constant 0 : i32
    %1 = arith.cmpi eq, %c16_i32, %c0_i32 : i32
    %c1_i32 = arith.constant 1 : i32
    %2 = arith.select %1, %c1_i32, %c16_i32 : i32
    %3 = vector.broadcast %2 : i32 to vector<1x256xi32>
    %4 = arith.remsi %0, %3 : vector<1x256xi32>
    %c0_i32_0 = arith.constant 0 : i32
    %5 = vector.broadcast %c0_i32_0 : i32 to vector<1x256xi32>
    %6 = arith.cmpi ne, %4, %5 : vector<1x256xi32>
    %c0_i32_1 = arith.constant 0 : i32
    %7 = vector.broadcast %c0_i32_1 : i32 to vector<1x256xi32>
    %8 = arith.cmpi slt, %4, %7 : vector<1x256xi32>
    %c0_i32_2 = arith.constant 0 : i32
    %9 = arith.cmpi slt, %2, %c0_i32_2 : i32
    %10 = vector.broadcast %9 : i1 to vector<1x256xi1>
    %11 = vector.broadcast %10 : vector<1x256xi1> to vector<1x256xi1>
    %12 = arith.xori %8, %11 : vector<1x256xi1>
    %13 = arith.andi %12, %6 : vector<1x256xi1>
    %14 = vector.broadcast %2 : i32 to vector<1x256xi32>
    %15 = arith.addi %4, %14 : vector<1x256xi32>
    %16 = arith.select %13, %15, %4 : vector<1x256xi1>, vector<1x256xi32>
    %c0_i32_3 = arith.constant 0 : i32
    %17 = vector.broadcast %c0_i32_3 : i32 to vector<1x256xi32>
    %18 = arith.cmpi ne, %16, %17 : vector<1x256xi32>
    %c15_i32 = arith.constant 15 : i32
    %19 = vector.broadcast %c15_i32 : i32 to vector<1x256xi32>
    %20 = arith.cmpi ne, %16, %19 : vector<1x256xi32>
    %cst = arith.constant 0.000000e+00 : f32
    %21 = vector.broadcast %cst : f32 to vector<48x256xf32>
    %c0 = arith.constant 0 : index
    %c0_4 = arith.constant 0 : index
    %c15 = arith.constant 15 : index
    %22 = vector.load %arg2[%c0, %c0_4, %c15] : memref<1x3x320xf32, #tpu.memory_space<vmem>>, vector<1x3x256xf32>
    %23 = vector.shape_cast %22 : vector<1x3x256xf32> to vector<3x256xf32>
    %cst_5 = arith.constant 0.000000e+00 : f32
    %24 = vector.shape_cast %18 : vector<1x256xi1> to vector<1x256xi1>
    %25 = vector.broadcast %24 : vector<1x256xi1> to vector<3x256xi1>
    %26 = vector.broadcast %cst_5 : f32 to vector<3x256xf32>
    %27 = arith.select %25, %23, %26 : vector<3x256xi1>, vector<3x256xf32>
    %c0_6 = arith.constant 0 : index
    %c0_7 = arith.constant 0 : index
    %c0_8 = arith.constant 0 : index
    %28 = vector.load %arg3[%c0_6, %c0_7, %c0_8] : memref<9x48x3xf32, #tpu.memory_space<vmem>>, vector<1x48x3xf32>
    %29 = vector.shape_cast %28 : vector<1x48x3xf32> to vector<48x3xf32>
    %cst_9 = arith.constant dense<0.000000e+00> : vector<48x256xf32>
    %30 = tpu.matmul %29, %27, %cst_9 {dimension_numbers = #tpu.dot_dimension_numbers<[1], [0], [0], [1], [0, 0, 1, 1], [], []>} : vector<48x3xf32>, vector<3x256xf32>, vector<48x256xf32> -> vector<48x256xf32>
    %31 = arith.addf %21, %30 : vector<48x256xf32>
    %c0_10 = arith.constant 0 : index
    %c0_11 = arith.constant 0 : index
    %c16 = arith.constant 16 : index
    %32 = vector.load %arg2[%c0_10, %c0_11, %c16] : memref<1x3x320xf32, #tpu.memory_space<vmem>>, vector<1x3x256xf32>
    %33 = vector.shape_cast %32 : vector<1x3x256xf32> to vector<3x256xf32>
    %c1 = arith.constant 1 : index
    %c0_12 = arith.constant 0 : index
    %c0_13 = arith.constant 0 : index
    %34 = vector.load %arg3[%c1, %c0_12, %c0_13] : memref<9x48x3xf32, #tpu.memory_space<vmem>>, vector<1x48x3xf32>
    %35 = vector.shape_cast %34 : vector<1x48x3xf32> to vector<48x3xf32>
    %cst_14 = arith.constant dense<0.000000e+00> : vector<48x256xf32>
    %36 = tpu.matmul %35, %33, %cst_14 {dimension_numbers = #tpu.dot_dimension_numbers<[1], [0], [0], [1], [0, 0, 1, 1], [], []>} : vector<48x3xf32>, vector<3x256xf32>, vector<48x256xf32> -> vector<48x256xf32>
    %37 = arith.addf %31, %36 : vector<48x256xf32>
    %c0_15 = arith.constant 0 : index
    %c0_16 = arith.constant 0 : index
    %c17 = arith.constant 17 : index
    %38 = vector.load %arg2[%c0_15, %c0_16, %c17] : memref<1x3x320xf32, #tpu.memory_space<vmem>>, vector<1x3x256xf32>
    %39 = vector.shape_cast %38 : vector<1x3x256xf32> to vector<3x256xf32>
    %cst_17 = arith.constant 0.000000e+00 : f32
    %40 = vector.shape_cast %20 : vector<1x256xi1> to vector<1x256xi1>
    %41 = vector.broadcast %40 : vector<1x256xi1> to vector<3x256xi1>
    %42 = vector.broadcast %cst_17 : f32 to vector<3x256xf32>
    %43 = arith.select %41, %39, %42 : vector<3x256xi1>, vector<3x256xf32>
    %c2 = arith.constant 2 : index
    %c0_18 = arith.constant 0 : index
    %c0_19 = arith.constant 0 : index
    %44 = vector.load %arg3[%c2, %c0_18, %c0_19] : memref<9x48x3xf32, #tpu.memory_space<vmem>>, vector<1x48x3xf32>
    %45 = vector.shape_cast %44 : vector<1x48x3xf32> to vector<48x3xf32>
    %cst_20 = arith.constant dense<0.000000e+00> : vector<48x256xf32>
    %46 = tpu.matmul %45, %43, %cst_20 {dimension_numbers = #tpu.dot_dimension_numbers<[1], [0], [0], [1], [0, 0, 1, 1], [], []>} : vector<48x3xf32>, vector<3x256xf32>, vector<48x256xf32> -> vector<48x256xf32>
    %47 = arith.addf %37, %46 : vector<48x256xf32>
    %c0_21 = arith.constant 0 : index
    %c0_22 = arith.constant 0 : index
    %c31 = arith.constant 31 : index
    %48 = vector.load %arg2[%c0_21, %c0_22, %c31] : memref<1x3x320xf32, #tpu.memory_space<vmem>>, vector<1x3x256xf32>
    %49 = vector.shape_cast %48 : vector<1x3x256xf32> to vector<3x256xf32>
    %cst_23 = arith.constant 0.000000e+00 : f32
    %50 = vector.shape_cast %18 : vector<1x256xi1> to vector<1x256xi1>
    %51 = vector.broadcast %50 : vector<1x256xi1> to vector<3x256xi1>
    %52 = vector.broadcast %cst_23 : f32 to vector<3x256xf32>
    %53 = arith.select %51, %49, %52 : vector<3x256xi1>, vector<3x256xf32>
    %c3 = arith.constant 3 : index
    %c0_24 = arith.constant 0 : index
    %c0_25 = arith.constant 0 : index
    %54 = vector.load %arg3[%c3, %c0_24, %c0_25] : memref<9x48x3xf32, #tpu.memory_space<vmem>>, vector<1x48x3xf32>
    %55 = vector.shape_cast %54 : vector<1x48x3xf32> to vector<48x3xf32>
    %cst_26 = arith.constant dense<0.000000e+00> : vector<48x256xf32>
    %56 = tpu.matmul %55, %53, %cst_26 {dimension_numbers = #tpu.dot_dimension_numbers<[1], [0], [0], [1], [0, 0, 1, 1], [], []>} : vector<48x3xf32>, vector<3x256xf32>, vector<48x256xf32> -> vector<48x256xf32>
    %57 = arith.addf %47, %56 : vector<48x256xf32>
    %c0_27 = arith.constant 0 : index
    %c0_28 = arith.constant 0 : index
    %c32 = arith.constant 32 : index
    %58 = vector.load %arg2[%c0_27, %c0_28, %c32] : memref<1x3x320xf32, #tpu.memory_space<vmem>>, vector<1x3x256xf32>
    %59 = vector.shape_cast %58 : vector<1x3x256xf32> to vector<3x256xf32>
    %c4 = arith.constant 4 : index
    %c0_29 = arith.constant 0 : index
    %c0_30 = arith.constant 0 : index
    %60 = vector.load %arg3[%c4, %c0_29, %c0_30] : memref<9x48x3xf32, #tpu.memory_space<vmem>>, vector<1x48x3xf32>
    %61 = vector.shape_cast %60 : vector<1x48x3xf32> to vector<48x3xf32>
    %cst_31 = arith.constant dense<0.000000e+00> : vector<48x256xf32>
    %62 = tpu.matmul %61, %59, %cst_31 {dimension_numbers = #tpu.dot_dimension_numbers<[1], [0], [0], [1], [0, 0, 1, 1], [], []>} : vector<48x3xf32>, vector<3x256xf32>, vector<48x256xf32> -> vector<48x256xf32>
    %63 = arith.addf %57, %62 : vector<48x256xf32>
    %c0_32 = arith.constant 0 : index
    %c0_33 = arith.constant 0 : index
    %c33 = arith.constant 33 : index
    %64 = vector.load %arg2[%c0_32, %c0_33, %c33] : memref<1x3x320xf32, #tpu.memory_space<vmem>>, vector<1x3x256xf32>
    %65 = vector.shape_cast %64 : vector<1x3x256xf32> to vector<3x256xf32>
    %cst_34 = arith.constant 0.000000e+00 : f32
    %66 = vector.shape_cast %20 : vector<1x256xi1> to vector<1x256xi1>
    %67 = vector.broadcast %66 : vector<1x256xi1> to vector<3x256xi1>
    %68 = vector.broadcast %cst_34 : f32 to vector<3x256xf32>
    %69 = arith.select %67, %65, %68 : vector<3x256xi1>, vector<3x256xf32>
    %c5 = arith.constant 5 : index
    %c0_35 = arith.constant 0 : index
    %c0_36 = arith.constant 0 : index
    %70 = vector.load %arg3[%c5, %c0_35, %c0_36] : memref<9x48x3xf32, #tpu.memory_space<vmem>>, vector<1x48x3xf32>
    %71 = vector.shape_cast %70 : vector<1x48x3xf32> to vector<48x3xf32>
    %cst_37 = arith.constant dense<0.000000e+00> : vector<48x256xf32>
    %72 = tpu.matmul %71, %69, %cst_37 {dimension_numbers = #tpu.dot_dimension_numbers<[1], [0], [0], [1], [0, 0, 1, 1], [], []>} : vector<48x3xf32>, vector<3x256xf32>, vector<48x256xf32> -> vector<48x256xf32>
    %73 = arith.addf %63, %72 : vector<48x256xf32>
    %c0_38 = arith.constant 0 : index
    %c0_39 = arith.constant 0 : index
    %c47 = arith.constant 47 : index
    %74 = vector.load %arg2[%c0_38, %c0_39, %c47] : memref<1x3x320xf32, #tpu.memory_space<vmem>>, vector<1x3x256xf32>
    %75 = vector.shape_cast %74 : vector<1x3x256xf32> to vector<3x256xf32>
    %cst_40 = arith.constant 0.000000e+00 : f32
    %76 = vector.shape_cast %18 : vector<1x256xi1> to vector<1x256xi1>
    %77 = vector.broadcast %76 : vector<1x256xi1> to vector<3x256xi1>
    %78 = vector.broadcast %cst_40 : f32 to vector<3x256xf32>
    %79 = arith.select %77, %75, %78 : vector<3x256xi1>, vector<3x256xf32>
    %c6 = arith.constant 6 : index
    %c0_41 = arith.constant 0 : index
    %c0_42 = arith.constant 0 : index
    %80 = vector.load %arg3[%c6, %c0_41, %c0_42] : memref<9x48x3xf32, #tpu.memory_space<vmem>>, vector<1x48x3xf32>
    %81 = vector.shape_cast %80 : vector<1x48x3xf32> to vector<48x3xf32>
    %cst_43 = arith.constant dense<0.000000e+00> : vector<48x256xf32>
    %82 = tpu.matmul %81, %79, %cst_43 {dimension_numbers = #tpu.dot_dimension_numbers<[1], [0], [0], [1], [0, 0, 1, 1], [], []>} : vector<48x3xf32>, vector<3x256xf32>, vector<48x256xf32> -> vector<48x256xf32>
    %83 = arith.addf %73, %82 : vector<48x256xf32>
    %c0_44 = arith.constant 0 : index
    %c0_45 = arith.constant 0 : index
    %c48 = arith.constant 48 : index
    %84 = vector.load %arg2[%c0_44, %c0_45, %c48] : memref<1x3x320xf32, #tpu.memory_space<vmem>>, vector<1x3x256xf32>
    %85 = vector.shape_cast %84 : vector<1x3x256xf32> to vector<3x256xf32>
    %c7 = arith.constant 7 : index
    %c0_46 = arith.constant 0 : index
    %c0_47 = arith.constant 0 : index
    %86 = vector.load %arg3[%c7, %c0_46, %c0_47] : memref<9x48x3xf32, #tpu.memory_space<vmem>>, vector<1x48x3xf32>
    %87 = vector.shape_cast %86 : vector<1x48x3xf32> to vector<48x3xf32>
    %cst_48 = arith.constant dense<0.000000e+00> : vector<48x256xf32>
    %88 = tpu.matmul %87, %85, %cst_48 {dimension_numbers = #tpu.dot_dimension_numbers<[1], [0], [0], [1], [0, 0, 1, 1], [], []>} : vector<48x3xf32>, vector<3x256xf32>, vector<48x256xf32> -> vector<48x256xf32>
    %89 = arith.addf %83, %88 : vector<48x256xf32>
    %c0_49 = arith.constant 0 : index
    %c0_50 = arith.constant 0 : index
    %c49 = arith.constant 49 : index
    %90 = vector.load %arg2[%c0_49, %c0_50, %c49] : memref<1x3x320xf32, #tpu.memory_space<vmem>>, vector<1x3x256xf32>
    %91 = vector.shape_cast %90 : vector<1x3x256xf32> to vector<3x256xf32>
    %cst_51 = arith.constant 0.000000e+00 : f32
    %92 = vector.shape_cast %20 : vector<1x256xi1> to vector<1x256xi1>
    %93 = vector.broadcast %92 : vector<1x256xi1> to vector<3x256xi1>
    %94 = vector.broadcast %cst_51 : f32 to vector<3x256xf32>
    %95 = arith.select %93, %91, %94 : vector<3x256xi1>, vector<3x256xf32>
    %c8 = arith.constant 8 : index
    %c0_52 = arith.constant 0 : index
    %c0_53 = arith.constant 0 : index
    %96 = vector.load %arg3[%c8, %c0_52, %c0_53] : memref<9x48x3xf32, #tpu.memory_space<vmem>>, vector<1x48x3xf32>
    %97 = vector.shape_cast %96 : vector<1x48x3xf32> to vector<48x3xf32>
    %cst_54 = arith.constant dense<0.000000e+00> : vector<48x256xf32>
    %98 = tpu.matmul %97, %95, %cst_54 {dimension_numbers = #tpu.dot_dimension_numbers<[1], [0], [0], [1], [0, 0, 1, 1], [], []>} : vector<48x3xf32>, vector<3x256xf32>, vector<48x256xf32> -> vector<48x256xf32>
    %99 = arith.addf %89, %98 : vector<48x256xf32>
    %c0_55 = arith.constant 0 : index
    %c0_56 = arith.constant 0 : index
    %c0_57 = arith.constant 0 : index
    %100 = vector.load %arg4[%c0_55, %c0_56, %c0_57] : memref<1x48x256xf32, #tpu.memory_space<vmem>>, vector<1x48x256xf32>
    %101 = vector.shape_cast %100 : vector<1x48x256xf32> to vector<48x256xf32>
    %102 = vector.shape_cast %99 : vector<48x256xf32> to vector<1x48x256xf32>
    tpu.vector_store %arg4[%c0_55, %c0_56, %c0_57], %102 {strides = array<i32>} : memref<1x48x256xf32, #tpu.memory_space<vmem>>, vector<1x48x256xf32>,
    return
  }
  func.func @transform_0(%arg0: i32, %arg1: i32) -> (i32, i32, i32) {
    %c0_i32 = arith.constant 0 : i32
    %c0_i32_0 = arith.constant 0 : i32
    %c0_i32_1 = arith.constant 0 : i32
    return %arg0, %c0_i32, %c0_i32_0 : i32, i32, i32
  }
  func.func @transform_1(%arg0: i32, %arg1: i32) -> (i32, i32, i32) {
    %c0_i32 = arith.constant 0 : i32
    %c0_i32_0 = arith.constant 0 : i32
    %c0_i32_1 = arith.constant 0 : i32
    return %c0_i32, %arg1, %c0_i32_0 : i32, i32, i32
  }
  func.func @transform_2(%arg0: i32, %arg1: i32) -> (i32, i32, i32) {
    %c0_i32 = arith.constant 0 : i32
    %c0_i32_0 = arith.constant 0 : i32
    return %arg0, %arg1, %c0_i32 : i32, i32, i32
  }
}

</mosaic_0001>

<llo_original>
// kernel: tpu_custom_call.1
$region0: #{tpu_custom_call.1}
  #allocation0 [shape = 'u32[]', space=smem, size = 0x4, offset = 0x4, fixed_abs, tag = 'smem constant byte address 0x4 - core index']
  #allocation1 [shape = 'u32[144,128]{1,0:T(1,128)}', space=vmem, size = 0x12000, scoped, tag = 'internal scratch']
  %s0 = inlined_call_operand.vmem [shape: f32[2,3,320], index: 0, kind: input, shape index: {}]
  %s1 = inlined_call_operand.vmem [shape: f32[9,48,3], index: 1, kind: input, shape index: {}]
  %s2 = inlined_call_operand.hbm [shape: f32[2,48,256], index: 2, kind: output, shape index: {}]
  %s3 = sld [smem:[#allocation0]]
  $region41: #{tpu_custom_call.1} parent=0
    _
  %s5 = ssub.s32 1, %s3
  %s6 = scalar_select 0, %s5, %s3
  $region1: #{tpu_custom_call.1} parent=0
    #allocation2 [shape = 'u8[98304]{0}', space=vmem, size = 0x18000, scoped, tag = 'output window, operand 0']
    #allocation3 [shape = 's32[2]{0}', space=sflag, size = 0x8, scoped, tag = 'scoped memory for tpu_custom_call.1']
    %7 = vsyncpa [#allocation3], 0
    %s8 = scalar_lea.sflag [#allocation3], 1
    %9 = vsyncpa %s8, 0
    loop: start=0, step=1, limit=4
    $region2: #{tpu_custom_call.1} parent=1 // loop_pre_header
      _
    $region3: #{tpu_custom_call.1} parent=1 // loop_header
      %s11 = sphi 0, %s15
      %p12 = scmp.ge.s32.totalorder %s11, 4
      %s18 = sphi 0, %s30
      %s19 = sphi 0, %s26
      %s20 = sphi 0, %s18
      %s21 = sphi 0, %s19
      %s22 = sphi 0, %s20
      %s23 = sphi 0, %s21
      %s33 = sphi 0, %s35
      %s36 = sphi 0, %s33
      %s37 = sphi 0, %s36
      %s53 = sphi 0, %s37
      %s59 = sphi 0, %s61
      %s62 = sphi 0, %s59
      %s63 = sphi 0, %s62
      %s79 = sphi 0, %s63
      %s87 = sphi 0, %s89
      %s90 = sphi 0, %s87
      %s91 = sphi 0, %s90
      %s107 = sphi 0, %s91
    $region4: #{tpu_custom_call.1} parent=1 // loop_header_branch
      %14 = sbr.rel (%p12) target = $region8
    $region5: #{tpu_custom_call.1} parent=1 // loop_body
      %s16 = ssub.s32 %s11, 1
      %s17 = ssub.s32 %s11, 2
      %s24 = sadd.s32 1, %s19
      %p25 = scmp.ge.s32.totalorder %s24, 1
      %s26 = scalar_select %p25, 0, %s24
      %s27 = sadd.s32 1, %s18
      %s28 = scalar_select %p25, %s27, %s18
      %p29 = scmp.ge.s32.totalorder %s28, 2
      %s30 = scalar_select %p29, 0, %s28
      %s31 = ssub.s32 %s18, %s30
      %p32 = scmp.eq.s32.totalorder %s31, 0
      %s34 = sadd.s32 %s33, 1
      %s35 = scalar_select %p32, %s33, %s34
      %p38 = pneg %p32
      %p39 = scmp.eq.s32.totalorder %s11, 1
      %p40 = por %p38, %p39
      %p41 = scmp.ne.s32.totalorder %s33, %s36
      %p42 = scmp.eq.s32.totalorder %s11, 0
      %p43 = por %p41, %p42
      %p44 = scmp.ne.s32.totalorder %s33, %s36
      %p45 = scmp.eq.s32.totalorder %s16, 1
      %p46 = por %p44, %p45
      %p47 = scmp.ne.s32.totalorder %s36, %s37
      %p48 = scmp.eq.s32.totalorder %s16, 0
      %p49 = por %p47, %p48
      %p50 = scmp.ne.s32.totalorder %s36, %s37
      %p51 = scmp.eq.s32.totalorder %s17, 1
      %p52 = por %p50, %p51
      %p54 = scmp.ne.s32.totalorder %s37, %s53
      %p55 = scmp.eq.s32.totalorder %s17, 0
      %p56 = por %p54, %p55
      %s57 = ssub.s32 %s19, %s26
      %p58 = scmp.eq.s32.totalorder %s57, 0
      %s60 = sadd.s32 %s59, 1
      %s61 = scalar_select %p58, %s59, %s60
      %p64 = pneg %p58
      %p65 = scmp.eq.s32.totalorder %s11, 1
      %p66 = por %p64, %p65
      %p67 = scmp.ne.s32.totalorder %s59, %s62
      %p68 = scmp.eq.s32.totalorder %s11, 0
      %p69 = por %p67, %p68
      %p70 = scmp.ne.s32.totalorder %s59, %s62
      %p71 = scmp.eq.s32.totalorder %s16, 1
      %p72 = por %p70, %p71
      %p73 = scmp.ne.s32.totalorder %s62, %s63
      %p74 = scmp.eq.s32.totalorder %s16, 0
      %p75 = por %p73, %p74
      %p76 = scmp.ne.s32.totalorder %s62, %s63
      %p77 = scmp.eq.s32.totalorder %s17, 1
      %p78 = por %p76, %p77
      %p80 = scmp.ne.s32.totalorder %s63, %s79
      %p81 = scmp.eq.s32.totalorder %s17, 0
      %p82 = por %p80, %p81
      %s83 = ssub.s32 %s18, %s30
      %s84 = ssub.s32 %s19, %s26
      %s85 = sor.u32 %s83, %s84
      %p86 = scmp.eq.s32.totalorder %s85, 0
      %s88 = sadd.s32 %s87, 1
      %s89 = scalar_select %p86, %s87, %s88
      %p92 = pneg %p86
      %p93 = scmp.eq.s32.totalorder %s11, 1
      %p94 = por %p92, %p93
      %p95 = scmp.ne.s32.totalorder %s87, %s90
      %p96 = scmp.eq.s32.totalorder %s11, 0
      %p97 = por %p95, %p96
      %p98 = scmp.ne.s32.totalorder %s87, %s90
      %p99 = scmp.eq.s32.totalorder %s16, 1
      %p100 = por %p98, %p99
      %p101 = scmp.ne.s32.totalorder %s90, %s91
      %p102 = scmp.eq.s32.totalorder %s16, 0
      %p103 = por %p101, %p102
      %p104 = scmp.ne.s32.totalorder %s90, %s91
      %p105 = scmp.eq.s32.totalorder %s17, 1
      %p106 = por %p104, %p105
      %p108 = scmp.ne.s32.totalorder %s91, %s107
      %p109 = scmp.eq.s32.totalorder %s17, 0
      %p110 = por %p108, %p109
      %p111 = scmp.le.s32.totalorder 1, %s11
      %p112 = scmp.lt.s32.totalorder %s11, 3
      %p113 = pnand %p111, %p112
      %p114 = pneg %p113
      // Predicated region
      $region9: #{tpu_custom_call.1} parent=5 // pred_check
        _
      $region10: #{tpu_custom_call.1} parent=5 // pred_check_branch
        %116 = sbr.rel (%p113) target = $region12
      $region11: #{tpu_custom_call.1} parent=5 // pred_region
        %s117 = ssub.s32 %s11, 1
        // Predicated region
        $region13: #{tpu_custom_call.1} parent=11 // pred_check
          %p118 = pneg %p75
        $region14: #{tpu_custom_call.1} parent=11 // pred_check_branch
          %120 = sbr.rel (%p118) target = $region16
        $region15: #{tpu_custom_call.1} parent=11 // pred_region
          %s121 = smul.u32 6, %s21
          %p122 = scmp.lt.s32.totalorder %s121, 5
          %s123 = scalar_select %p122, %s121, 5
          %s124 = smul.addr %s123, 8
          %s125 = scalar_lea.vmem %s1, %s124
          %s126 = smul.u32 6, %s21
        $region16: #{tpu_custom_call.1} parent=11 // pred_fallthru
          _
      $region12: #{tpu_custom_call.1} parent=5 // pred_fallthru
        _
      %p127 = scmp.lt.s32.totalorder %s11, 2
      // Predicated region
      $region17: #{tpu_custom_call.1} parent=5 // pred_check
        %p128 = pneg %p127
      $region18: #{tpu_custom_call.1} parent=5 // pred_check_branch
        %130 = sbr.rel (%p128) target = $region20
      $region19: #{tpu_custom_call.1} parent=5 // pred_region
        // Predicated region
        $region21: #{tpu_custom_call.1} parent=19 // pred_check
          %p131 = pneg %p43
        $region22: #{tpu_custom_call.1} parent=19 // pred_check_branch
          %133 = sbr.rel (%p131) target = $region24
        $region23: #{tpu_custom_call.1} parent=19 // pred_region
          %p134 = scmp.lt.s32.totalorder %s18, 1
          %s135 = scalar_select %p134, %s18, 1
          %s136 = smul.addr %s135, 3
          %s137 = smul.addr %s136, 4
          %s138 = scalar_lea.vmem %s0, %s137
        $region24: #{tpu_custom_call.1} parent=19 // pred_fallthru
          _
      $region20: #{tpu_custom_call.1} parent=5 // pred_fallthru
        _
      %p139 = scmp.le.s32.totalorder 1, %s11
      %p140 = scmp.lt.s32.totalorder %s11, 3
      %p141 = pnand %p139, %p140
      %p142 = pneg %p141
      // Predicated region
      $region25: #{tpu_custom_call.1} parent=5 // pred_check
        _
      $region26: #{tpu_custom_call.1} parent=5 // pred_check_branch
        %144 = sbr.rel (%p141) target = $region28
      $region27: #{tpu_custom_call.1} parent=5 // pred_region
        %s145 = ssub.s32 %s11, 1
        %p146 = scmp.lt.s32.totalorder %s20, 1
        %s147 = scalar_select %p146, %s20, 1
        %s148 = smul.addr %s147, 3
        %s149 = smul.addr %s148, 4
        %s150 = scalar_lea.vmem %s0, %s149
        %p151 = pneg %p49
        %p152 = pneg %p46
        %s153 = smul.u32 6, %s21
        %p154 = scmp.lt.s32.totalorder %s153, 5
        %s155 = scalar_select %p154, %s153, 5
        %s156 = smul.addr %s155, 8
        %s157 = scalar_lea.vmem %s1, %s156
        %p158 = pneg %p75
        %p159 = pneg %p72
        %p160 = pneg %p103
        %p161 = pneg %p100
        %s162 = sand.u32 %s90, 1
        %s163 = scalar_lea.sflag [#allocation3], %s162
        %s164 = sand.u32 %s90, 1
        %s165 = smul.addr %s164, 96
        %s166 = scalar_lea.vmem [#allocation2], %s165
        %p167 = scmp.lt.s32.totalorder %s20, 1
        %s168 = scalar_select %p167, %s20, 1
        %s169 = smul.addr %s168, 3
        %s170 = smul.addr %s169, 4
        %s171 = scalar_lea.vmem %s0, %s170
        %s172 = smul.u32 6, %s21
        %p173 = scmp.lt.s32.totalorder %s172, 5
        %s174 = scalar_select %p173, %s172, 5
        %s175 = smul.addr %s174, 8
        %s176 = scalar_lea.vmem %s1, %s175
        %s177 = smul.u32 6, %s21
        %s178 = smul.u32 6, %s21
        %v179 = vlaneseq
        %v180 = vand.u32 %v179, 127
        %v181 = vadd.s32 %v180, 128
        %vm182 = vcmp.lt.s32.totalorder %v180, 0
        %v183 = vsub.s32 0, %v180
        %v184 = vsel %vm182, %v183, %v180
        %v185 = vshrl.u32 %v184, 4
        %v186 = vand.u32 %v184, 15
        %v187 = vsub.s32 0, %v186
        %v188 = vsel %vm182, %v187, %v186
        %vm189 = vcmp.lt.s32.totalorder %v181, 0
        %v190 = vsub.s32 0, %v181
        %v191 = vsel %vm189, %v190, %v181
        %v192 = vshrl.u32 %v191, 4
        %v193 = vand.u32 %v191, 15
        %v194 = vsub.s32 0, %v193
        %v195 = vsel %vm189, %v194, %v193
        %vm196 = vcmp.ne.s32.totalorder %v188, 0
        %vm197 = vcmp.ne.s32.totalorder %v195, 0
        %vm198 = vcmp.lt.s32.totalorder %v188, 0
        %vm199 = vcmp.lt.s32.totalorder %v195, 0
        %vm200 = vmand %vm198, %vm196
        %vm201 = vmand %vm199, %vm197
        %v202 = vadd.s32 %v188, 16
        %v203 = vadd.s32 %v195, 16
        %v204 = vsel %vm200, %v202, %v188
        %v205 = vsel %vm201, %v203, %v195
        %vm206 = vcmp.ne.s32.totalorder %v204, 0
        %vm207 = vcmp.ne.s32.totalorder %v205, 0
        %vm208 = vcmp.ne.s32.totalorder %v204, 15
        %vm209 = vcmp.ne.s32.totalorder %v205, 15
        %v210 = vld [vmem:[%s171] sm:$0x77]
        %v211 = vld [vmem:[%s171 + $0x8] sm:$0x7]
        %v212 = vsel %vm206, 1, 0
        %v213 = vsel %vm207, 1, 0
        %vm214 = vcmp.eq.s32.totalorder %v212, 1
        %vm215 = vcmp.eq.s32.totalorder %v213, 1
        %v218 = vcombine.high %v210, %v210
        %219 = vrot.lane.b32.xlu0 %v210, 113
        %v220 = vpop.permute.xlu0 %219
        %221 = vrot.lane.b32.xlu0 %v218, 113
        %v222 = vpop.permute.xlu0 %221
        %223 = vrot.lane.b32.xlu0 %v211, 113
        %v224 = vpop.permute.xlu0 %223
        %vm225 = vcmask 924672
        %v226 = vsel %vm225, %v220, %v222
        %v227 = vsel %vm225, %v222, %v224
        %v230 = vsel %vm214, %v226, 0.0
        %v231 = vsel %vm215, %v227, 0.0
        %v232 = vld [vmem:[%s176] sm:$0xff]
        %v233 = vld [vmem:[%s176 + $0x8] sm:$0xff]
        %v234 = vld [vmem:[%s176 + $0x10] sm:$0xff]
        %v235 = vld [vmem:[%s176 + $0x18] sm:$0xff]
        %v236 = vld [vmem:[%s176 + $0x20] sm:$0xff]
        %v237 = vld [vmem:[%s176 + $0x28] sm:$0xff]
        %s238 = scalar_lea.vmem %s176, 48
        %v239 = vld [vmem:[%s238] sm:$0xff]
        %v240 = vld [vmem:[%s238 + $0x8] sm:$0xff]
        %v241 = vld [vmem:[%s238 + $0x10] sm:$0xff]
        %v242 = vld [vmem:[%s238 + $0x18] sm:$0xff]
        %v243 = vld [vmem:[%s238 + $0x20] sm:$0xff]
        %v244 = vld [vmem:[%s238 + $0x28] sm:$0xff]
        %245 = vrot.lane.b32.xlu0 %v210, 112
        %v246 = vpop.permute.xlu0 %245
        %247 = vrot.lane.b32.xlu0 %v218, 112
        %v248 = vpop.permute.xlu0 %247
        %249 = vrot.lane.b32.xlu0 %v211, 112
        %v250 = vpop.permute.xlu0 %249
        %vm251 = vcmask 916480
        %v252 = vsel %vm251, %v246, %v248
        %v253 = vsel %vm251, %v248, %v250
        %vm254 = vcmask 23552
        %v256 = vsel %vm254, %v239, 0
        %v259 = vsel %vm254, %v240, 0
        %v262 = vsel %vm254, %v241, 0
        %v265 = vsel %vm254, %v242, 0
        %v268 = vsel %vm254, %v243, 0
        %v271 = vsel %vm254, %v244, 0
        %vm273 = vcmask 1042432
        %v274 = vsel %vm273, %v252, 0
        %v276 = vsel %vm273, %v253, 0
        %278 = vmatprep.subr.mxu0 0.0
        %279 = vmatpush1.msra.mxu0 0.0
        %280 = vmatprep.subr.mxu0 0.0
        %281 = vmatpush1.msra.mxu0 0.0
        %282 = vmatprep.subr.mxu0 0.0
        %283 = vmatpush1.msra.mxu0 0.0
        %284 = vmatprep.subr.mxu0 0.0
        %285 = vmatpush1.msra.mxu0 0.0
        %286 = vmatprep.subr.mxu0 0.0
        %287 = vmatpush1.msra.mxu0 0.0
        %288 = vmatprep.subr.mxu0 0.0
        %289 = vmatpush1.msra.mxu0 0.0
        %290 = vmatprep.subr.mxu0 0.0
        %291 = vmatpush1.msra.mxu0 0.0
        %292 = vmatprep.subr.mxu0 0.0
        %293 = vmatpush1.msra.mxu0 0.0
        %294 = vmatprep.subr.mxu0 0.0
        %295 = vmatpush1.msra.mxu0 0.0
        %296 = vmatprep.subr.mxu0 0.0
        %297 = vmatpush1.msra.mxu0 0.0
        %298 = vmatprep.subr.mxu0 0.0
        %299 = vmatpush1.msra.mxu0 0.0
        %300 = vmatprep.subr.mxu0 0.0
        %301 = vmatpush1.msra.mxu0 0.0
        %302 = vmatprep.subr.mxu0 0.0
        %303 = vmatpush1.msra.mxu0 0.0
        %304 = vmatprep.subr.mxu0 0.0
        %305 = vmatpush1.msra.mxu0 0.0
        %306 = vmatprep.subr.mxu0 0.0
        %307 = vmatpush1.msra.mxu0 0.0
        %308 = vmatprep.subr.mxu0 %v276
        %309 = vmatpush1.msra.mxu0 %v274
        %310 = vmatprep.subr.mxu0 0.0
        %311 = vmatpush2.msra.mxu0 0.0
        %312 = vmatprep.subr.mxu0 0.0
        %313 = vmatpush2.msra.mxu0 0.0
        %314 = vmatprep.subr.mxu0 0.0
        %315 = vmatpush2.msra.mxu0 0.0
        %316 = vmatprep.subr.mxu0 0.0
        %317 = vmatpush2.msra.mxu0 0.0
        %318 = vmatprep.subr.mxu0 0.0
        %319 = vmatpush2.msra.mxu0 0.0
        %320 = vmatprep.subr.mxu0 0.0
        %321 = vmatpush2.msra.mxu0 0.0
        %322 = vmatprep.subr.mxu0 0.0
        %323 = vmatpush2.msra.mxu0 0.0
        %324 = vmatprep.subr.mxu0 0.0
        %325 = vmatpush2.msra.mxu0 0.0
        %326 = vmatprep.subr.mxu0 0.0
        %327 = vmatpush2.msra.mxu0 0.0
        %328 = vmatprep.subr.mxu0 0.0
        %329 = vmatpush2.msra.mxu0 0.0
        %330 = vmatprep.subr.mxu0 0.0
        %331 = vmatpush2.msra.mxu0 0.0
        %332 = vmatprep.subr.mxu0 0.0
        %333 = vmatpush2.msra.mxu0 0.0
        %334 = vmatprep.subr.mxu0 0.0
        %335 = vmatpush2.msra.mxu0 0.0
        %336 = vmatprep.subr.mxu0 0.0
        %337 = vmatpush2.msra.mxu0 0.0
        %338 = vmatprep.subr.mxu0 0.0
        %339 = vmatpush2.msra.mxu0 0.0
        %340 = vmatprep.subr.mxu0 0.0
        %341 = vmatpush2.msra.mxu0 0.0
        %342 = vmatprep.mubr.f32.mxu0 0.0
        %343 = vmatmul.mubr.f32.gmra.mxu0 %v256
        %v344 = vpop.f32.mrf.mxu0
        %v345 = vadd.f32 0.0, %v344
        %v346 = vpop.f32.mrf.mxu0
        %v347 = vadd.f32 0.0, %v346
        %348 = vmatprep.mubr.f32.mxu0 0.0
        %349 = vmatmul.mubr.f32.gmra.mxu0 %v259
        %v350 = vpop.f32.mrf.mxu0
        %v351 = vadd.f32 0.0, %v350
        %v352 = vpop.f32.mrf.mxu0
        %v353 = vadd.f32 0.0, %v352
        %354 = vmatprep.mubr.f32.mxu0 0.0
        %355 = vmatmul.mubr.f32.gmra.mxu0 %v262
        %v356 = vpop.f32.mrf.mxu0
        %v357 = vadd.f32 0.0, %v356
        %v358 = vpop.f32.mrf.mxu0
        %v359 = vadd.f32 0.0, %v358
        %360 = vmatprep.mubr.f32.mxu0 0.0
        %361 = vmatmul.mubr.f32.gmra.mxu0 %v265
        %v362 = vpop.f32.mrf.mxu0
        %v363 = vadd.f32 0.0, %v362
        %v364 = vpop.f32.mrf.mxu0
        %v365 = vadd.f32 0.0, %v364
        %366 = vmatprep.mubr.f32.mxu0 0.0
        %367 = vmatmul.mubr.f32.gmra.mxu0 %v268
        %v368 = vpop.f32.mrf.mxu0
        %v369 = vadd.f32 0.0, %v368
        %v370 = vpop.f32.mrf.mxu0
        %v371 = vadd.f32 0.0, %v370
        %372 = vmatprep.mubr.f32.mxu0 0.0
        %373 = vmatmul.mubr.f32.gmra.mxu0 %v271
        %v374 = vpop.f32.mrf.mxu0
        %v375 = vadd.f32 0.0, %v374
        %v376 = vpop.f32.mrf.mxu0
        %v377 = vadd.f32 0.0, %v376
        %378 = vdwg.mxu0
        %v380 = vsel %vm254, %v232, 0
        %v383 = vsel %vm254, %v233, 0
        %v386 = vsel %vm254, %v234, 0
        %v389 = vsel %vm254, %v235, 0
        %v392 = vsel %vm254, %v236, 0
        %v395 = vsel %vm254, %v237, 0
        %v398 = vsel %vm273, %v230, 0
        %v401 = vsel %vm273, %v231, 0
        %403 = vmatprep.subr.mxu0 0.0
        %404 = vmatpush1.msra.mxu0 0.0
        %405 = vmatprep.subr.mxu0 0.0
        %406 = vmatpush1.msra.mxu0 0.0
        %407 = vmatprep.subr.mxu0 0.0
        %408 = vmatpush1.msra.mxu0 0.0
        %409 = vmatprep.subr.mxu0 0.0
        %410 = vmatpush1.msra.mxu0 0.0
        %411 = vmatprep.subr.mxu0 0.0
        %412 = vmatpush1.msra.mxu0 0.0
        %413 = vmatprep.subr.mxu0 0.0
        %414 = vmatpush1.msra.mxu0 0.0
        %415 = vmatprep.subr.mxu0 0.0
        %416 = vmatpush1.msra.mxu0 0.0
        %417 = vmatprep.subr.mxu0 0.0
        %418 = vmatpush1.msra.mxu0 0.0
        %419 = vmatprep.subr.mxu0 0.0
        %420 = vmatpush1.msra.mxu0 0.0
        %421 = vmatprep.subr.mxu0 0.0
        %422 = vmatpush1.msra.mxu0 0.0
        %423 = vmatprep.subr.mxu0 0.0
        %424 = vmatpush1.msra.mxu0 0.0
        %425 = vmatprep.subr.mxu0 0.0
        %426 = vmatpush1.msra.mxu0 0.0
        %427 = vmatprep.subr.mxu0 0.0
        %428 = vmatpush1.msra.mxu0 0.0
        %429 = vmatprep.subr.mxu0 0.0
        %430 = vmatpush1.msra.mxu0 0.0
        %431 = vmatprep.subr.mxu0 0.0
        %432 = vmatpush1.msra.mxu0 0.0
        %433 = vmatprep.subr.mxu0 %v401
        %434 = vmatpush1.msra.mxu0 %v398
        %435 = vmatprep.subr.mxu0 0.0
        %436 = vmatpush2.msra.mxu0 0.0
        %437 = vmatprep.subr.mxu0 0.0
        %438 = vmatpush2.msra.mxu0 0.0
        %439 = vmatprep.subr.mxu0 0.0
        %440 = vmatpush2.msra.mxu0 0.0
        %441 = vmatprep.subr.mxu0 0.0
        %442 = vmatpush2.msra.mxu0 0.0
        %443 = vmatprep.subr.mxu0 0.0
        %444 = vmatpush2.msra.mxu0 0.0
        %445 = vmatprep.subr.mxu0 0.0
        %446 = vmatpush2.msra.mxu0 0.0
        %447 = vmatprep.subr.mxu0 0.0
        %448 = vmatpush2.msra.mxu0 0.0
        %449 = vmatprep.subr.mxu0 0.0
        %450 = vmatpush2.msra.mxu0 0.0
        %451 = vmatprep.subr.mxu0 0.0
        %452 = vmatpush2.msra.mxu0 0.0
        %453 = vmatprep.subr.mxu0 0.0
        %454 = vmatpush2.msra.mxu0 0.0
        %455 = vmatprep.subr.mxu0 0.0
        %456 = vmatpush2.msra.mxu0 0.0
        %457 = vmatprep.subr.mxu0 0.0
        %458 = vmatpush2.msra.mxu0 0.0
        %459 = vmatprep.subr.mxu0 0.0
        %460 = vmatpush2.msra.mxu0 0.0
        %461 = vmatprep.subr.mxu0 0.0
        %462 = vmatpush2.msra.mxu0 0.0
        %463 = vmatprep.subr.mxu0 0.0
        %464 = vmatpush2.msra.mxu0 0.0
        %465 = vmatprep.subr.mxu0 0.0
        %466 = vmatpush2.msra.mxu0 0.0
        %467 = vmatprep.mubr.f32.mxu0 0.0
        %468 = vmatmul.mubr.f32.gmra.mxu0 %v380
        %v469 = vpop.f32.mrf.mxu0
        %v470 = vadd.f32 %v345, %v469
        %v471 = vpop.f32.mrf.mxu0
        %v472 = vadd.f32 %v347, %v471
        %473 = vmatprep.mubr.f32.mxu0 0.0
        %474 = vmatmul.mubr.f32.gmra.mxu0 %v383
        %v475 = vpop.f32.mrf.mxu0
        %v476 = vadd.f32 %v351, %v475
        %v477 = vpop.f32.mrf.mxu0
        %v478 = vadd.f32 %v353, %v477
        %479 = vmatprep.mubr.f32.mxu0 0.0
        %480 = vmatmul.mubr.f32.gmra.mxu0 %v386
        %v481 = vpop.f32.mrf.mxu0
        %v482 = vadd.f32 %v357, %v481
        %v483 = vpop.f32.mrf.mxu0
        %v484 = vadd.f32 %v359, %v483
        %485 = vmatprep.mubr.f32.mxu0 0.0
        %486 = vmatmul.mubr.f32.gmra.mxu0 %v389
        %v487 = vpop.f32.mrf.mxu0
        %v488 = vadd.f32 %v363, %v487
        %v489 = vpop.f32.mrf.mxu0
        %v490 = vadd.f32 %v365, %v489
        %491 = vmatprep.mubr.f32.mxu0 0.0
        %492 = vmatmul.mubr.f32.gmra.mxu0 %v392
        %v493 = vpop.f32.mrf.mxu0
        %v494 = vadd.f32 %v369, %v493
        %v495 = vpop.f32.mrf.mxu0
        %v496 = vadd.f32 %v371, %v495
        %497 = vmatprep.mubr.f32.mxu0 0.0
        %498 = vmatmul.mubr.f32.gmra.mxu0 %v395
        %v499 = vpop.f32.mrf.mxu0
        %v500 = vadd.f32 %v375, %v499
        %v501 = vpop.f32.mrf.mxu0
        %v502 = vadd.f32 %v377, %v501
        %503 = vdwg.mxu0
        %v504 = vld [vmem:[%s171] sm:$0x77]
        %v505 = vld [vmem:[%s171 + $0x8] sm:$0x7]
        %v506 = vsel %vm208, 1, 0
        %v507 = vsel %vm209, 1, 0
        %vm508 = vcmp.eq.s32.totalorder %v506, 1
        %vm509 = vcmp.eq.s32.totalorder %v507, 1
        %v512 = vcombine.high %v504, %v504
        %513 = vrot.lane.b32.xlu0 %v504, 111
        %v514 = vpop.permute.xlu0 %513
        %515 = vrot.lane.b32.xlu0 %v512, 111
        %v516 = vpop.permute.xlu0 %515
        %517 = vrot.lane.b32.xlu0 %v505, 111
        %v518 = vpop.permute.xlu0 %517
        %vm519 = vcmask 908288
        %v520 = vsel %vm519, %v514, %v516
        %v521 = vsel %vm519, %v516, %v518
        %v524 = vsel %vm508, %v520, 0.0
        %v525 = vsel %vm509, %v521, 0.0
        %s526 = scalar_lea.vmem %s176, 96
        %v527 = vld [vmem:[%s526] sm:$0xff]
        %v528 = vld [vmem:[%s526 + $0x8] sm:$0xff]
        %v529 = vld [vmem:[%s526 + $0x10] sm:$0xff]
        %v530 = vld [vmem:[%s526 + $0x18] sm:$0xff]
        %v531 = vld [vmem:[%s526 + $0x20] sm:$0xff]
        %v532 = vld [vmem:[%s526 + $0x28] sm:$0xff]
        %v534 = vsel %vm254, %v527, 0
        %v537 = vsel %vm254, %v528, 0
        %v540 = vsel %vm254, %v529, 0
        %v543 = vsel %vm254, %v530, 0
        %v546 = vsel %vm254, %v531, 0
        %v549 = vsel %vm254, %v532, 0
        %v552 = vsel %vm273, %v524, 0
        %v555 = vsel %vm273, %v525, 0
        %557 = vmatprep.subr.mxu0 0.0
        %558 = vmatpush1.msra.mxu0 0.0
        %559 = vmatprep.subr.mxu0 0.0
        %560 = vmatpush1.msra.mxu0 0.0
        %561 = vmatprep.subr.mxu0 0.0
        %562 = vmatpush1.msra.mxu0 0.0
        %563 = vmatprep.subr.mxu0 0.0
        %564 = vmatpush1.msra.mxu0 0.0
        %565 = vmatprep.subr.mxu0 0.0
        %566 = vmatpush1.msra.mxu0 0.0
        %567 = vmatprep.subr.mxu0 0.0
        %568 = vmatpush1.msra.mxu0 0.0
        %569 = vmatprep.subr.mxu0 0.0
        %570 = vmatpush1.msra.mxu0 0.0
        %571 = vmatprep.subr.mxu0 0.0
        %572 = vmatpush1.msra.mxu0 0.0
        %573 = vmatprep.subr.mxu0 0.0
        %574 = vmatpush1.msra.mxu0 0.0
        %575 = vmatprep.subr.mxu0 0.0
        %576 = vmatpush1.msra.mxu0 0.0
        %577 = vmatprep.subr.mxu0 0.0
        %578 = vmatpush1.msra.mxu0 0.0
        %579 = vmatprep.subr.mxu0 0.0
        %580 = vmatpush1.msra.mxu0 0.0
        %581 = vmatprep.subr.mxu0 0.0
        %582 = vmatpush1.msra.mxu0 0.0
        %583 = vmatprep.subr.mxu0 0.0
        %584 = vmatpush1.msra.mxu0 0.0
        %585 = vmatprep.subr.mxu0 0.0
        %586 = vmatpush1.msra.mxu0 0.0
        %587 = vmatprep.subr.mxu0 %v555
        %588 = vmatpush1.msra.mxu0 %v552
        %589 = vmatprep.subr.mxu0 0.0
        %590 = vmatpush2.msra.mxu0 0.0
        %591 = vmatprep.subr.mxu0 0.0
        %592 = vmatpush2.msra.mxu0 0.0
        %593 = vmatprep.subr.mxu0 0.0
        %594 = vmatpush2.msra.mxu0 0.0
        %595 = vmatprep.subr.mxu0 0.0
        %596 = vmatpush2.msra.mxu0 0.0
        %597 = vmatprep.subr.mxu0 0.0
        %598 = vmatpush2.msra.mxu0 0.0
        %599 = vmatprep.subr.mxu0 0.0
        %600 = vmatpush2.msra.mxu0 0.0
        %601 = vmatprep.subr.mxu0 0.0
        %602 = vmatpush2.msra.mxu0 0.0
        %603 = vmatprep.subr.mxu0 0.0
        %604 = vmatpush2.msra.mxu0 0.0
        %605 = vmatprep.subr.mxu0 0.0
        %606 = vmatpush2.msra.mxu0 0.0
        %607 = vmatprep.subr.mxu0 0.0
        %608 = vmatpush2.msra.mxu0 0.0
        %609 = vmatprep.subr.mxu0 0.0
        %610 = vmatpush2.msra.mxu0 0.0
        %611 = vmatprep.subr.mxu0 0.0
        %612 = vmatpush2.msra.mxu0 0.0
        %613 = vmatprep.subr.mxu0 0.0
        %614 = vmatpush2.msra.mxu0 0.0
        %615 = vmatprep.subr.mxu0 0.0
        %616 = vmatpush2.msra.mxu0 0.0
        %617 = vmatprep.subr.mxu0 0.0
        %618 = vmatpush2.msra.mxu0 0.0
        %619 = vmatprep.subr.mxu0 0.0
        %620 = vmatpush2.msra.mxu0 0.0
        %621 = vmatprep.mubr.f32.mxu0 0.0
        %622 = vmatmul.mubr.f32.gmra.mxu0 %v534
        %v623 = vpop.f32.mrf.mxu0
        %v624 = vadd.f32 0.0, %v623
        %v625 = vpop.f32.mrf.mxu0
        %v626 = vadd.f32 0.0, %v625
        %627 = vmatprep.mubr.f32.mxu0 0.0
        %628 = vmatmul.mubr.f32.gmra.mxu0 %v537
        %v629 = vpop.f32.mrf.mxu0
        %v630 = vadd.f32 0.0, %v629
        %v631 = vpop.f32.mrf.mxu0
        %v632 = vadd.f32 0.0, %v631
        %633 = vmatprep.mubr.f32.mxu0 0.0
        %634 = vmatmul.mubr.f32.gmra.mxu0 %v540
        %v635 = vpop.f32.mrf.mxu0
        %v636 = vadd.f32 0.0, %v635
        %v637 = vpop.f32.mrf.mxu0
        %v638 = vadd.f32 0.0, %v637
        %639 = vmatprep.mubr.f32.mxu0 0.0
        %640 = vmatmul.mubr.f32.gmra.mxu0 %v543
        %v641 = vpop.f32.mrf.mxu0
        %v642 = vadd.f32 0.0, %v641
        %v643 = vpop.f32.mrf.mxu0
        %v644 = vadd.f32 0.0, %v643
        %645 = vmatprep.mubr.f32.mxu0 0.0
        %646 = vmatmul.mubr.f32.gmra.mxu0 %v546
        %v647 = vpop.f32.mrf.mxu0
        %v648 = vadd.f32 0.0, %v647
        %v649 = vpop.f32.mrf.mxu0
        %v650 = vadd.f32 0.0, %v649
        %651 = vmatprep.mubr.f32.mxu0 0.0
        %652 = vmatmul.mubr.f32.gmra.mxu0 %v549
        %v653 = vpop.f32.mrf.mxu0
        %v654 = vadd.f32 0.0, %v653
        %v655 = vpop.f32.mrf.mxu0
        %v656 = vadd.f32 0.0, %v655
        %657 = vdwg.mxu0
        %v658 = vadd.f32 %v470, %v624
        %v659 = vadd.f32 %v472, %v626
        %v660 = vadd.f32 %v476, %v630
        %v661 = vadd.f32 %v478, %v632
        %v662 = vadd.f32 %v482, %v636
        %v663 = vadd.f32 %v484, %v638
        %v664 = vadd.f32 %v488, %v642
        %v665 = vadd.f32 %v490, %v644
        %v666 = vadd.f32 %v494, %v648
        %v667 = vadd.f32 %v496, %v650
        %v668 = vadd.f32 %v500, %v654
        %v669 = vadd.f32 %v502, %v656
        %v670 = vld [vmem:[%s171] sm:$0x77]
        %v671 = vld [vmem:[%s171 + $0x8] sm:$0x7]
        %v674 = vcombine.high %v670, %v670
        %675 = vrot.lane.b32.xlu0 %v670, 97
        %v676 = vpop.permute.xlu0 %675
        %677 = vrot.lane.b32.xlu0 %v674, 97
        %v678 = vpop.permute.xlu0 %677
        %679 = vrot.lane.b32.xlu0 %v671, 97
        %v680 = vpop.permute.xlu0 %679
        %vm681 = vcmask 793600
        %v682 = vsel %vm681, %v676, %v678
        %v683 = vsel %vm681, %v678, %v680
        %v686 = vsel %vm214, %v682, 0.0
        %v687 = vsel %vm215, %v683, 0.0
        %s688 = scalar_lea.vmem %s176, 144
        %v689 = vld [vmem:[%s688] sm:$0xff]
        %v690 = vld [vmem:[%s688 + $0x8] sm:$0xff]
        %v691 = vld [vmem:[%s688 + $0x10] sm:$0xff]
        %v692 = vld [vmem:[%s688 + $0x18] sm:$0xff]
        %v693 = vld [vmem:[%s688 + $0x20] sm:$0xff]
        %v694 = vld [vmem:[%s688 + $0x28] sm:$0xff]
        %v696 = vsel %vm254, %v689, 0
        %v699 = vsel %vm254, %v690, 0
        %v702 = vsel %vm254, %v691, 0
        %v705 = vsel %vm254, %v692, 0
        %v708 = vsel %vm254, %v693, 0
        %v711 = vsel %vm254, %v694, 0
        %v714 = vsel %vm273, %v686, 0
        %v717 = vsel %vm273, %v687, 0
        %719 = vmatprep.subr.mxu0 0.0
        %720 = vmatpush1.msra.mxu0 0.0
        %721 = vmatprep.subr.mxu0 0.0
        %722 = vmatpush1.msra.mxu0 0.0
        %723 = vmatprep.subr.mxu0 0.0
        %724 = vmatpush1.msra.mxu0 0.0
        %725 = vmatprep.subr.mxu0 0.0
        %726 = vmatpush1.msra.mxu0 0.0
        %727 = vmatprep.subr.mxu0 0.0
        %728 = vmatpush1.msra.mxu0 0.0
        %729 = vmatprep.subr.mxu0 0.0
        %730 = vmatpush1.msra.mxu0 0.0
        %731 = vmatprep.subr.mxu0 0.0
        %732 = vmatpush1.msra.mxu0 0.0
        %733 = vmatprep.subr.mxu0 0.0
        %734 = vmatpush1.msra.mxu0 0.0
        %735 = vmatprep.subr.mxu0 0.0
        %736 = vmatpush1.msra.mxu0 0.0
        %737 = vmatprep.subr.mxu0 0.0
        %738 = vmatpush1.msra.mxu0 0.0
        %739 = vmatprep.subr.mxu0 0.0
        %740 = vmatpush1.msra.mxu0 0.0
        %741 = vmatprep.subr.mxu0 0.0
        %742 = vmatpush1.msra.mxu0 0.0
        %743 = vmatprep.subr.mxu0 0.0
        %744 = vmatpush1.msra.mxu0 0.0
        %745 = vmatprep.subr.mxu0 0.0
        %746 = vmatpush1.msra.mxu0 0.0
        %747 = vmatprep.subr.mxu0 0.0
        %748 = vmatpush1.msra.mxu0 0.0
        %749 = vmatprep.subr.mxu0 %v717
        %750 = vmatpush1.msra.mxu0 %v714
        %751 = vmatprep.subr.mxu0 0.0
        %752 = vmatpush2.msra.mxu0 0.0
        %753 = vmatprep.subr.mxu0 0.0
        %754 = vmatpush2.msra.mxu0 0.0
        %755 = vmatprep.subr.mxu0 0.0
        %756 = vmatpush2.msra.mxu0 0.0
        %757 = vmatprep.subr.mxu0 0.0
        %758 = vmatpush2.msra.mxu0 0.0
        %759 = vmatprep.subr.mxu0 0.0
        %760 = vmatpush2.msra.mxu0 0.0
        %761 = vmatprep.subr.mxu0 0.0
        %762 = vmatpush2.msra.mxu0 0.0
        %763 = vmatprep.subr.mxu0 0.0
        %764 = vmatpush2.msra.mxu0 0.0
        %765 = vmatprep.subr.mxu0 0.0
        %766 = vmatpush2.msra.mxu0 0.0
        %767 = vmatprep.subr.mxu0 0.0
        %768 = vmatpush2.msra.mxu0 0.0
        %769 = vmatprep.subr.mxu0 0.0
        %770 = vmatpush2.msra.mxu0 0.0
        %771 = vmatprep.subr.mxu0 0.0
        %772 = vmatpush2.msra.mxu0 0.0
        %773 = vmatprep.subr.mxu0 0.0
        %774 = vmatpush2.msra.mxu0 0.0
        %775 = vmatprep.subr.mxu0 0.0
        %776 = vmatpush2.msra.mxu0 0.0
        %777 = vmatprep.subr.mxu0 0.0
        %778 = vmatpush2.msra.mxu0 0.0
        %779 = vmatprep.subr.mxu0 0.0
        %780 = vmatpush2.msra.mxu0 0.0
        %781 = vmatprep.subr.mxu0 0.0
        %782 = vmatpush2.msra.mxu0 0.0
        %783 = vmatprep.mubr.f32.mxu0 0.0
        %784 = vmatmul.mubr.f32.gmra.mxu0 %v696
        %v785 = vpop.f32.mrf.mxu0
        %v786 = vadd.f32 0.0, %v785
        %v787 = vpop.f32.mrf.mxu0
        %v788 = vadd.f32 0.0, %v787
        %789 = vmatprep.mubr.f32.mxu0 0.0
        %790 = vmatmul.mubr.f32.gmra.mxu0 %v699
        %v791 = vpop.f32.mrf.mxu0
        %v792 = vadd.f32 0.0, %v791
        %v793 = vpop.f32.mrf.mxu0
        %v794 = vadd.f32 0.0, %v793
        %795 = vmatprep.mubr.f32.mxu0 0.0
        %796 = vmatmul.mubr.f32.gmra.mxu0 %v702
        %v797 = vpop.f32.mrf.mxu0
        %v798 = vadd.f32 0.0, %v797
        %v799 = vpop.f32.mrf.mxu0
        %v800 = vadd.f32 0.0, %v799
        %801 = vmatprep.mubr.f32.mxu0 0.0
        %802 = vmatmul.mubr.f32.gmra.mxu0 %v705
        %v803 = vpop.f32.mrf.mxu0
        %v804 = vadd.f32 0.0, %v803
        %v805 = vpop.f32.mrf.mxu0
        %v806 = vadd.f32 0.0, %v805
        %807 = vmatprep.mubr.f32.mxu0 0.0
        %808 = vmatmul.mubr.f32.gmra.mxu0 %v708
        %v809 = vpop.f32.mrf.mxu0
        %v810 = vadd.f32 0.0, %v809
        %v811 = vpop.f32.mrf.mxu0
        %v812 = vadd.f32 0.0, %v811
        %813 = vmatprep.mubr.f32.mxu0 0.0
        %814 = vmatmul.mubr.f32.gmra.mxu0 %v711
        %v815 = vpop.f32.mrf.mxu0
        %v816 = vadd.f32 0.0, %v815
        %v817 = vpop.f32.mrf.mxu0
        %v818 = vadd.f32 0.0, %v817
        %819 = vdwg.mxu0
        %v820 = vadd.f32 %v658, %v786
        %v821 = vadd.f32 %v659, %v788
        %v822 = vadd.f32 %v660, %v792
        %v823 = vadd.f32 %v661, %v794
        %v824 = vadd.f32 %v662, %v798
        %v825 = vadd.f32 %v663, %v800
        %v826 = vadd.f32 %v664, %v804
        %v827 = vadd.f32 %v665, %v806
        %v828 = vadd.f32 %v666, %v810
        %v829 = vadd.f32 %v667, %v812
        %v830 = vadd.f32 %v668, %v816
        %v831 = vadd.f32 %v669, %v818
        %v832 = vld [vmem:[%s171] sm:$0x77]
        %v833 = vld [vmem:[%s171 + $0x8] sm:$0x7]
        %s834 = scalar_lea.vmem %s176, 192
        %v835 = vld [vmem:[%s834] sm:$0xff]
        %v836 = vld [vmem:[%s834 + $0x8] sm:$0xff]
        %v837 = vld [vmem:[%s834 + $0x10] sm:$0xff]
        %v838 = vld [vmem:[%s834 + $0x18] sm:$0xff]
        %v839 = vld [vmem:[%s834 + $0x20] sm:$0xff]
        %v840 = vld [vmem:[%s834 + $0x28] sm:$0xff]
        %v843 = vcombine.high %v832, %v832
        %844 = vrot.lane.b32.xlu0 %v832, 96
        %v845 = vpop.permute.xlu0 %844
        %846 = vrot.lane.b32.xlu0 %v843, 96
        %v847 = vpop.permute.xlu0 %846
        %848 = vrot.lane.b32.xlu0 %v833, 96
        %v849 = vpop.permute.xlu0 %848
        %vm850 = vcmask 785408
        %v851 = vsel %vm850, %v845, %v847
        %v852 = vsel %vm850, %v847, %v849
        %v854 = vsel %vm254, %v835, 0
        %v857 = vsel %vm254, %v836, 0
        %v860 = vsel %vm254, %v837, 0
        %v863 = vsel %vm254, %v838, 0
        %v866 = vsel %vm254, %v839, 0
        %v869 = vsel %vm254, %v840, 0
        %v871 = vsel %vm273, %v851, 0
        %v873 = vsel %vm273, %v852, 0
        %875 = vmatprep.subr.mxu0 0.0
        %876 = vmatpush1.msra.mxu0 0.0
        %877 = vmatprep.subr.mxu0 0.0
        %878 = vmatpush1.msra.mxu0 0.0
        %879 = vmatprep.subr.mxu0 0.0
        %880 = vmatpush1.msra.mxu0 0.0
        %881 = vmatprep.subr.mxu0 0.0
        %882 = vmatpush1.msra.mxu0 0.0
        %883 = vmatprep.subr.mxu0 0.0
        %884 = vmatpush1.msra.mxu0 0.0
        %885 = vmatprep.subr.mxu0 0.0
        %886 = vmatpush1.msra.mxu0 0.0
        %887 = vmatprep.subr.mxu0 0.0
        %888 = vmatpush1.msra.mxu0 0.0
        %889 = vmatprep.subr.mxu0 0.0
        %890 = vmatpush1.msra.mxu0 0.0
        %891 = vmatprep.subr.mxu0 0.0
        %892 = vmatpush1.msra.mxu0 0.0
        %893 = vmatprep.subr.mxu0 0.0
        %894 = vmatpush1.msra.mxu0 0.0
        %895 = vmatprep.subr.mxu0 0.0
        %896 = vmatpush1.msra.mxu0 0.0
        %897 = vmatprep.subr.mxu0 0.0
        %898 = vmatpush1.msra.mxu0 0.0
        %899 = vmatprep.subr.mxu0 0.0
        %900 = vmatpush1.msra.mxu0 0.0
        %901 = vmatprep.subr.mxu0 0.0
        %902 = vmatpush1.msra.mxu0 0.0
        %903 = vmatprep.subr.mxu0 0.0
        %904 = vmatpush1.msra.mxu0 0.0
        %905 = vmatprep.subr.mxu0 %v873
        %906 = vmatpush1.msra.mxu0 %v871
        %907 = vmatprep.subr.mxu0 0.0
        %908 = vmatpush2.msra.mxu0 0.0
        %909 = vmatprep.subr.mxu0 0.0
        %910 = vmatpush2.msra.mxu0 0.0
        %911 = vmatprep.subr.mxu0 0.0
        %912 = vmatpush2.msra.mxu0 0.0
        %913 = vmatprep.subr.mxu0 0.0
        %914 = vmatpush2.msra.mxu0 0.0
        %915 = vmatprep.subr.mxu0 0.0
        %916 = vmatpush2.msra.mxu0 0.0
        %917 = vmatprep.subr.mxu0 0.0
        %918 = vmatpush2.msra.mxu0 0.0
        %919 = vmatprep.subr.mxu0 0.0
        %920 = vmatpush2.msra.mxu0 0.0
        %921 = vmatprep.subr.mxu0 0.0
        %922 = vmatpush2.msra.mxu0 0.0
        %923 = vmatprep.subr.mxu0 0.0
        %924 = vmatpush2.msra.mxu0 0.0
        %925 = vmatprep.subr.mxu0 0.0
        %926 = vmatpush2.msra.mxu0 0.0
        %927 = vmatprep.subr.mxu0 0.0
        %928 = vmatpush2.msra.mxu0 0.0
        %929 = vmatprep.subr.mxu0 0.0
        %930 = vmatpush2.msra.mxu0 0.0
        %931 = vmatprep.subr.mxu0 0.0
        %932 = vmatpush2.msra.mxu0 0.0
        %933 = vmatprep.subr.mxu0 0.0
        %934 = vmatpush2.msra.mxu0 0.0
        %935 = vmatprep.subr.mxu0 0.0
        %936 = vmatpush2.msra.mxu0 0.0
        %937 = vmatprep.subr.mxu0 0.0
        %938 = vmatpush2.msra.mxu0 0.0
        %939 = vmatprep.mubr.f32.mxu0 0.0
        %940 = vmatmul.mubr.f32.gmra.mxu0 %v854
        %v941 = vpop.f32.mrf.mxu0
        %v942 = vadd.f32 0.0, %v941
        %v943 = vpop.f32.mrf.mxu0
        %v944 = vadd.f32 0.0, %v943
        %945 = vmatprep.mubr.f32.mxu0 0.0
        %946 = vmatmul.mubr.f32.gmra.mxu0 %v857
        %v947 = vpop.f32.mrf.mxu0
        %v948 = vadd.f32 0.0, %v947
        %v949 = vpop.f32.mrf.mxu0
        %v950 = vadd.f32 0.0, %v949
        %951 = vmatprep.mubr.f32.mxu0 0.0
        %952 = vmatmul.mubr.f32.gmra.mxu0 %v860
        %v953 = vpop.f32.mrf.mxu0
        %v954 = vadd.f32 0.0, %v953
        %v955 = vpop.f32.mrf.mxu0
        %v956 = vadd.f32 0.0, %v955
        %957 = vmatprep.mubr.f32.mxu0 0.0
        %958 = vmatmul.mubr.f32.gmra.mxu0 %v863
        %v959 = vpop.f32.mrf.mxu0
        %v960 = vadd.f32 0.0, %v959
        %v961 = vpop.f32.mrf.mxu0
        %v962 = vadd.f32 0.0, %v961
        %963 = vmatprep.mubr.f32.mxu0 0.0
        %964 = vmatmul.mubr.f32.gmra.mxu0 %v866
        %v965 = vpop.f32.mrf.mxu0
        %v966 = vadd.f32 0.0, %v965
        %v967 = vpop.f32.mrf.mxu0
        %v968 = vadd.f32 0.0, %v967
        %969 = vmatprep.mubr.f32.mxu0 0.0
        %970 = vmatmul.mubr.f32.gmra.mxu0 %v869
        %v971 = vpop.f32.mrf.mxu0
        %v972 = vadd.f32 0.0, %v971
        %v973 = vpop.f32.mrf.mxu0
        %v974 = vadd.f32 0.0, %v973
        %975 = vdwg.mxu0
        %v976 = vadd.f32 %v820, %v942
        %v977 = vadd.f32 %v821, %v944
        %v978 = vadd.f32 %v822, %v948
        %v979 = vadd.f32 %v823, %v950
        %v980 = vadd.f32 %v824, %v954
        %v981 = vadd.f32 %v825, %v956
        %v982 = vadd.f32 %v826, %v960
        %v983 = vadd.f32 %v827, %v962
        %v984 = vadd.f32 %v828, %v966
        %v985 = vadd.f32 %v829, %v968
        %v986 = vadd.f32 %v830, %v972
        %v987 = vadd.f32 %v831, %v974
        %v988 = vld [vmem:[%s171] sm:$0x77]
        %v989 = vld [vmem:[%s171 + $0x8] sm:$0x7]
        %v992 = vcombine.high %v988, %v988
        %993 = vrot.lane.b32.xlu0 %v988, 95
        %v994 = vpop.permute.xlu0 %993
        %995 = vrot.lane.b32.xlu0 %v992, 95
        %v996 = vpop.permute.xlu0 %995
        %997 = vrot.lane.b32.xlu0 %v989, 95
        %v998 = vpop.permute.xlu0 %997
        %vm999 = vcmask 777216
        %v1000 = vsel %vm999, %v994, %v996
        %v1001 = vsel %vm999, %v996, %v998
        %v1004 = vsel %vm508, %v1000, 0.0
        %v1005 = vsel %vm509, %v1001, 0.0
        %s1006 = scalar_lea.vmem %s176, 240
        %v1007 = vld [vmem:[%s1006] sm:$0xff]
        %v1008 = vld [vmem:[%s1006 + $0x8] sm:$0xff]
        %v1009 = vld [vmem:[%s1006 + $0x10] sm:$0xff]
        %v1010 = vld [vmem:[%s1006 + $0x18] sm:$0xff]
        %v1011 = vld [vmem:[%s1006 + $0x20] sm:$0xff]
        %v1012 = vld [vmem:[%s1006 + $0x28] sm:$0xff]
        %v1014 = vsel %vm254, %v1007, 0
        %v1017 = vsel %vm254, %v1008, 0
        %v1020 = vsel %vm254, %v1009, 0
        %v1023 = vsel %vm254, %v1010, 0
        %v1026 = vsel %vm254, %v1011, 0
        %v1029 = vsel %vm254, %v1012, 0
        %v1032 = vsel %vm273, %v1004, 0
        %v1035 = vsel %vm273, %v1005, 0
        %1037 = vmatprep.subr.mxu0 0.0
        %1038 = vmatpush1.msra.mxu0 0.0
        %1039 = vmatprep.subr.mxu0 0.0
        %1040 = vmatpush1.msra.mxu0 0.0
        %1041 = vmatprep.subr.mxu0 0.0
        %1042 = vmatpush1.msra.mxu0 0.0
        %1043 = vmatprep.subr.mxu0 0.0
        %1044 = vmatpush1.msra.mxu0 0.0
        %1045 = vmatprep.subr.mxu0 0.0
        %1046 = vmatpush1.msra.mxu0 0.0
        %1047 = vmatprep.subr.mxu0 0.0
        %1048 = vmatpush1.msra.mxu0 0.0
        %1049 = vmatprep.subr.mxu0 0.0
        %1050 = vmatpush1.msra.mxu0 0.0
        %1051 = vmatprep.subr.mxu0 0.0
        %1052 = vmatpush1.msra.mxu0 0.0
        %1053 = vmatprep.subr.mxu0 0.0
        %1054 = vmatpush1.msra.mxu0 0.0
        %1055 = vmatprep.subr.mxu0 0.0
        %1056 = vmatpush1.msra.mxu0 0.0
        %1057 = vmatprep.subr.mxu0 0.0
        %1058 = vmatpush1.msra.mxu0 0.0
        %1059 = vmatprep.subr.mxu0 0.0
        %1060 = vmatpush1.msra.mxu0 0.0
        %1061 = vmatprep.subr.mxu0 0.0
        %1062 = vmatpush1.msra.mxu0 0.0
        %1063 = vmatprep.subr.mxu0 0.0
        %1064 = vmatpush1.msra.mxu0 0.0
        %1065 = vmatprep.subr.mxu0 0.0
        %1066 = vmatpush1.msra.mxu0 0.0
        %1067 = vmatprep.subr.mxu0 %v1035
        %1068 = vmatpush1.msra.mxu0 %v1032
        %1069 = vmatprep.subr.mxu0 0.0
        %1070 = vmatpush2.msra.mxu0 0.0
        %1071 = vmatprep.subr.mxu0 0.0
        %1072 = vmatpush2.msra.mxu0 0.0
        %1073 = vmatprep.subr.mxu0 0.0
        %1074 = vmatpush2.msra.mxu0 0.0
        %1075 = vmatprep.subr.mxu0 0.0
        %1076 = vmatpush2.msra.mxu0 0.0
        %1077 = vmatprep.subr.mxu0 0.0
        %1078 = vmatpush2.msra.mxu0 0.0
        %1079 = vmatprep.subr.mxu0 0.0
        %1080 = vmatpush2.msra.mxu0 0.0
        %1081 = vmatprep.subr.mxu0 0.0
        %1082 = vmatpush2.msra.mxu0 0.0
        %1083 = vmatprep.subr.mxu0 0.0
        %1084 = vmatpush2.msra.mxu0 0.0
        %1085 = vmatprep.subr.mxu0 0.0
        %1086 = vmatpush2.msra.mxu0 0.0
        %1087 = vmatprep.subr.mxu0 0.0
        %1088 = vmatpush2.msra.mxu0 0.0
        %1089 = vmatprep.subr.mxu0 0.0
        %1090 = vmatpush2.msra.mxu0 0.0
        %1091 = vmatprep.subr.mxu0 0.0
        %1092 = vmatpush2.msra.mxu0 0.0
        %1093 = vmatprep.subr.mxu0 0.0
        %1094 = vmatpush2.msra.mxu0 0.0
        %1095 = vmatprep.subr.mxu0 0.0
        %1096 = vmatpush2.msra.mxu0 0.0
        %1097 = vmatprep.subr.mxu0 0.0
        %1098 = vmatpush2.msra.mxu0 0.0
        %1099 = vmatprep.subr.mxu0 0.0
        %1100 = vmatpush2.msra.mxu0 0.0
        %1101 = vmatprep.mubr.f32.mxu0 0.0
        %1102 = vmatmul.mubr.f32.gmra.mxu0 %v1014
        %v1103 = vpop.f32.mrf.mxu0
        %v1104 = vadd.f32 0.0, %v1103
        %v1105 = vpop.f32.mrf.mxu0
        %v1106 = vadd.f32 0.0, %v1105
        %1107 = vmatprep.mubr.f32.mxu0 0.0
        %1108 = vmatmul.mubr.f32.gmra.mxu0 %v1017
        %v1109 = vpop.f32.mrf.mxu0
        %v1110 = vadd.f32 0.0, %v1109
        %v1111 = vpop.f32.mrf.mxu0
        %v1112 = vadd.f32 0.0, %v1111
        %1113 = vmatprep.mubr.f32.mxu0 0.0
        %1114 = vmatmul.mubr.f32.gmra.mxu0 %v1020
        %v1115 = vpop.f32.mrf.mxu0
        %v1116 = vadd.f32 0.0, %v1115
        %v1117 = vpop.f32.mrf.mxu0
        %v1118 = vadd.f32 0.0, %v1117
        %1119 = vmatprep.mubr.f32.mxu0 0.0
        %1120 = vmatmul.mubr.f32.gmra.mxu0 %v1023
        %v1121 = vpop.f32.mrf.mxu0
        %v1122 = vadd.f32 0.0, %v1121
        %v1123 = vpop.f32.mrf.mxu0
        %v1124 = vadd.f32 0.0, %v1123
        %1125 = vmatprep.mubr.f32.mxu0 0.0
        %1126 = vmatmul.mubr.f32.gmra.mxu0 %v1026
        %v1127 = vpop.f32.mrf.mxu0
        %v1128 = vadd.f32 0.0, %v1127
        %v1129 = vpop.f32.mrf.mxu0
        %v1130 = vadd.f32 0.0, %v1129
        %1131 = vmatprep.mubr.f32.mxu0 0.0
        %1132 = vmatmul.mubr.f32.gmra.mxu0 %v1029
        %v1133 = vpop.f32.mrf.mxu0
        %v1134 = vadd.f32 0.0, %v1133
        %v1135 = vpop.f32.mrf.mxu0
        %v1136 = vadd.f32 0.0, %v1135
        %1137 = vdwg.mxu0
        %v1138 = vadd.f32 %v976, %v1104
        %v1139 = vadd.f32 %v977, %v1106
        %v1140 = vadd.f32 %v978, %v1110
        %v1141 = vadd.f32 %v979, %v1112
        %v1142 = vadd.f32 %v980, %v1116
        %v1143 = vadd.f32 %v981, %v1118
        %v1144 = vadd.f32 %v982, %v1122
        %v1145 = vadd.f32 %v983, %v1124
        %v1146 = vadd.f32 %v984, %v1128
        %v1147 = vadd.f32 %v985, %v1130
        %v1148 = vadd.f32 %v986, %v1134
        %v1149 = vadd.f32 %v987, %v1136
        %v1150 = vld [vmem:[%s171] sm:$0x77]
        %v1151 = vld [vmem:[%s171 + $0x8] sm:$0x7]
        %v1154 = vcombine.high %v1150, %v1150
        %1155 = vrot.lane.b32.xlu0 %v1150, 81
        %v1156 = vpop.permute.xlu0 %1155
        %1157 = vrot.lane.b32.xlu0 %v1154, 81
        %v1158 = vpop.permute.xlu0 %1157
        %1159 = vrot.lane.b32.xlu0 %v1151, 81
        %v1160 = vpop.permute.xlu0 %1159
        %vm1161 = vcmask 662528
        %v1162 = vsel %vm1161, %v1156, %v1158
        %v1163 = vsel %vm1161, %v1158, %v1160
        %v1166 = vsel %vm214, %v1162, 0.0
        %v1167 = vsel %vm215, %v1163, 0.0
        %s1168 = scalar_lea.vmem %s176, 288
        %v1169 = vld [vmem:[%s1168] sm:$0xff]
        %v1170 = vld [vmem:[%s1168 + $0x8] sm:$0xff]
        %v1171 = vld [vmem:[%s1168 + $0x10] sm:$0xff]
        %v1172 = vld [vmem:[%s1168 + $0x18] sm:$0xff]
        %v1173 = vld [vmem:[%s1168 + $0x20] sm:$0xff]
        %v1174 = vld [vmem:[%s1168 + $0x28] sm:$0xff]
        %v1176 = vsel %vm254, %v1169, 0
        %v1179 = vsel %vm254, %v1170, 0
        %v1182 = vsel %vm254, %v1171, 0
        %v1185 = vsel %vm254, %v1172, 0
        %v1188 = vsel %vm254, %v1173, 0
        %v1191 = vsel %vm254, %v1174, 0
        %v1194 = vsel %vm273, %v1166, 0
        %v1197 = vsel %vm273, %v1167, 0
        %1199 = vmatprep.subr.mxu0 0.0
        %1200 = vmatpush1.msra.mxu0 0.0
        %1201 = vmatprep.subr.mxu0 0.0
        %1202 = vmatpush1.msra.mxu0 0.0
        %1203 = vmatprep.subr.mxu0 0.0
        %1204 = vmatpush1.msra.mxu0 0.0
        %1205 = vmatprep.subr.mxu0 0.0
        %1206 = vmatpush1.msra.mxu0 0.0
        %1207 = vmatprep.subr.mxu0 0.0
        %1208 = vmatpush1.msra.mxu0 0.0
        %1209 = vmatprep.subr.mxu0 0.0
        %1210 = vmatpush1.msra.mxu0 0.0
        %1211 = vmatprep.subr.mxu0 0.0
        %1212 = vmatpush1.msra.mxu0 0.0
        %1213 = vmatprep.subr.mxu0 0.0
        %1214 = vmatpush1.msra.mxu0 0.0
        %1215 = vmatprep.subr.mxu0 0.0
        %1216 = vmatpush1.msra.mxu0 0.0
        %1217 = vmatprep.subr.mxu0 0.0
        %1218 = vmatpush1.msra.mxu0 0.0
        %1219 = vmatprep.subr.mxu0 0.0
        %1220 = vmatpush1.msra.mxu0 0.0
        %1221 = vmatprep.subr.mxu0 0.0
        %1222 = vmatpush1.msra.mxu0 0.0
        %1223 = vmatprep.subr.mxu0 0.0
        %1224 = vmatpush1.msra.mxu0 0.0
        %1225 = vmatprep.subr.mxu0 0.0
        %1226 = vmatpush1.msra.mxu0 0.0
        %1227 = vmatprep.subr.mxu0 0.0
        %1228 = vmatpush1.msra.mxu0 0.0
        %1229 = vmatprep.subr.mxu0 %v1197
        %1230 = vmatpush1.msra.mxu0 %v1194
        %1231 = vmatprep.subr.mxu0 0.0
        %1232 = vmatpush2.msra.mxu0 0.0
        %1233 = vmatprep.subr.mxu0 0.0
        %1234 = vmatpush2.msra.mxu0 0.0
        %1235 = vmatprep.subr.mxu0 0.0
        %1236 = vmatpush2.msra.mxu0 0.0
        %1237 = vmatprep.subr.mxu0 0.0
        %1238 = vmatpush2.msra.mxu0 0.0
        %1239 = vmatprep.subr.mxu0 0.0
        %1240 = vmatpush2.msra.mxu0 0.0
        %1241 = vmatprep.subr.mxu0 0.0
        %1242 = vmatpush2.msra.mxu0 0.0
        %1243 = vmatprep.subr.mxu0 0.0
        %1244 = vmatpush2.msra.mxu0 0.0
        %1245 = vmatprep.subr.mxu0 0.0
        %1246 = vmatpush2.msra.mxu0 0.0
        %1247 = vmatprep.subr.mxu0 0.0
        %1248 = vmatpush2.msra.mxu0 0.0
        %1249 = vmatprep.subr.mxu0 0.0
        %1250 = vmatpush2.msra.mxu0 0.0
        %1251 = vmatprep.subr.mxu0 0.0
        %1252 = vmatpush2.msra.mxu0 0.0
        %1253 = vmatprep.subr.mxu0 0.0
        %1254 = vmatpush2.msra.mxu0 0.0
        %1255 = vmatprep.subr.mxu0 0.0
        %1256 = vmatpush2.msra.mxu0 0.0
        %1257 = vmatprep.subr.mxu0 0.0
        %1258 = vmatpush2.msra.mxu0 0.0
        %1259 = vmatprep.subr.mxu0 0.0
        %1260 = vmatpush2.msra.mxu0 0.0
        %1261 = vmatprep.subr.mxu0 0.0
        %1262 = vmatpush2.msra.mxu0 0.0
        %1263 = vmatprep.mubr.f32.mxu0 0.0
        %1264 = vmatmul.mubr.f32.gmra.mxu0 %v1176
        %v1265 = vpop.f32.mrf.mxu0
        %v1266 = vadd.f32 0.0, %v1265
        %v1267 = vpop.f32.mrf.mxu0
        %v1268 = vadd.f32 0.0, %v1267
        %1269 = vmatprep.mubr.f32.mxu0 0.0
        %1270 = vmatmul.mubr.f32.gmra.mxu0 %v1179
        %v1271 = vpop.f32.mrf.mxu0
        %v1272 = vadd.f32 0.0, %v1271
        %v1273 = vpop.f32.mrf.mxu0
        %v1274 = vadd.f32 0.0, %v1273
        %1275 = vmatprep.mubr.f32.mxu0 0.0
        %1276 = vmatmul.mubr.f32.gmra.mxu0 %v1182
        %v1277 = vpop.f32.mrf.mxu0
        %v1278 = vadd.f32 0.0, %v1277
        %v1279 = vpop.f32.mrf.mxu0
        %v1280 = vadd.f32 0.0, %v1279
        %1281 = vmatprep.mubr.f32.mxu0 0.0
        %1282 = vmatmul.mubr.f32.gmra.mxu0 %v1185
        %v1283 = vpop.f32.mrf.mxu0
        %v1284 = vadd.f32 0.0, %v1283
        %v1285 = vpop.f32.mrf.mxu0
        %v1286 = vadd.f32 0.0, %v1285
        %1287 = vmatprep.mubr.f32.mxu0 0.0
        %1288 = vmatmul.mubr.f32.gmra.mxu0 %v1188
        %v1289 = vpop.f32.mrf.mxu0
        %v1290 = vadd.f32 0.0, %v1289
        %v1291 = vpop.f32.mrf.mxu0
        %v1292 = vadd.f32 0.0, %v1291
        %1293 = vmatprep.mubr.f32.mxu0 0.0
        %1294 = vmatmul.mubr.f32.gmra.mxu0 %v1191
        %v1295 = vpop.f32.mrf.mxu0
        %v1296 = vadd.f32 0.0, %v1295
        %v1297 = vpop.f32.mrf.mxu0
        %v1298 = vadd.f32 0.0, %v1297
        %1299 = vdwg.mxu0
        %v1300 = vadd.f32 %v1138, %v1266
        %v1301 = vadd.f32 %v1139, %v1268
        %v1302 = vadd.f32 %v1140, %v1272
        %v1303 = vadd.f32 %v1141, %v1274
        %v1304 = vadd.f32 %v1142, %v1278
        %v1305 = vadd.f32 %v1143, %v1280
        %v1306 = vadd.f32 %v1144, %v1284
        %v1307 = vadd.f32 %v1145, %v1286
        %v1308 = vadd.f32 %v1146, %v1290
        %v1309 = vadd.f32 %v1147, %v1292
        %v1310 = vadd.f32 %v1148, %v1296
        %v1311 = vadd.f32 %v1149, %v1298
        %v1312 = vld [vmem:[%s171] sm:$0x77]
        %v1313 = vld [vmem:[%s171 + $0x8] sm:$0x7]
        %s1314 = scalar_lea.vmem %s176, 336
        %v1315 = vld [vmem:[%s1314] sm:$0xff]
        %v1316 = vld [vmem:[%s1314 + $0x8] sm:$0xff]
        %v1317 = vld [vmem:[%s1314 + $0x10] sm:$0xff]
        %v1318 = vld [vmem:[%s1314 + $0x18] sm:$0xff]
        %v1319 = vld [vmem:[%s1314 + $0x20] sm:$0xff]
        %v1320 = vld [vmem:[%s1314 + $0x28] sm:$0xff]
        %v1323 = vcombine.high %v1312, %v1312
        %1324 = vrot.lane.b32.xlu0 %v1312, 80
        %v1325 = vpop.permute.xlu0 %1324
        %1326 = vrot.lane.b32.xlu0 %v1323, 80
        %v1327 = vpop.permute.xlu0 %1326
        %1328 = vrot.lane.b32.xlu0 %v1313, 80
        %v1329 = vpop.permute.xlu0 %1328
        %vm1330 = vcmask 654336
        %v1331 = vsel %vm1330, %v1325, %v1327
        %v1332 = vsel %vm1330, %v1327, %v1329
        %v1334 = vsel %vm254, %v1315, 0
        %v1337 = vsel %vm254, %v1316, 0
        %v1340 = vsel %vm254, %v1317, 0
        %v1343 = vsel %vm254, %v1318, 0
        %v1346 = vsel %vm254, %v1319, 0
        %v1349 = vsel %vm254, %v1320, 0
        %v1351 = vsel %vm273, %v1331, 0
        %v1353 = vsel %vm273, %v1332, 0
        %1355 = vmatprep.subr.mxu0 0.0
        %1356 = vmatpush1.msra.mxu0 0.0
        %1357 = vmatprep.subr.mxu0 0.0
        %1358 = vmatpush1.msra.mxu0 0.0
        %1359 = vmatprep.subr.mxu0 0.0
        %1360 = vmatpush1.msra.mxu0 0.0
        %1361 = vmatprep.subr.mxu0 0.0
        %1362 = vmatpush1.msra.mxu0 0.0
        %1363 = vmatprep.subr.mxu0 0.0
        %1364 = vmatpush1.msra.mxu0 0.0
        %1365 = vmatprep.subr.mxu0 0.0
        %1366 = vmatpush1.msra.mxu0 0.0
        %1367 = vmatprep.subr.mxu0 0.0
        %1368 = vmatpush1.msra.mxu0 0.0
        %1369 = vmatprep.subr.mxu0 0.0
        %1370 = vmatpush1.msra.mxu0 0.0
        %1371 = vmatprep.subr.mxu0 0.0
        %1372 = vmatpush1.msra.mxu0 0.0
        %1373 = vmatprep.subr.mxu0 0.0
        %1374 = vmatpush1.msra.mxu0 0.0
        %1375 = vmatprep.subr.mxu0 0.0
        %1376 = vmatpush1.msra.mxu0 0.0
        %1377 = vmatprep.subr.mxu0 0.0
        %1378 = vmatpush1.msra.mxu0 0.0
        %1379 = vmatprep.subr.mxu0 0.0
        %1380 = vmatpush1.msra.mxu0 0.0
        %1381 = vmatprep.subr.mxu0 0.0
        %1382 = vmatpush1.msra.mxu0 0.0
        %1383 = vmatprep.subr.mxu0 0.0
        %1384 = vmatpush1.msra.mxu0 0.0
        %1385 = vmatprep.subr.mxu0 %v1353
        %1386 = vmatpush1.msra.mxu0 %v1351
        %1387 = vmatprep.subr.mxu0 0.0
        %1388 = vmatpush2.msra.mxu0 0.0
        %1389 = vmatprep.subr.mxu0 0.0
        %1390 = vmatpush2.msra.mxu0 0.0
        %1391 = vmatprep.subr.mxu0 0.0
        %1392 = vmatpush2.msra.mxu0 0.0
        %1393 = vmatprep.subr.mxu0 0.0
        %1394 = vmatpush2.msra.mxu0 0.0
        %1395 = vmatprep.subr.mxu0 0.0
        %1396 = vmatpush2.msra.mxu0 0.0
        %1397 = vmatprep.subr.mxu0 0.0
        %1398 = vmatpush2.msra.mxu0 0.0
        %1399 = vmatprep.subr.mxu0 0.0
        %1400 = vmatpush2.msra.mxu0 0.0
        %1401 = vmatprep.subr.mxu0 0.0
        %1402 = vmatpush2.msra.mxu0 0.0
        %1403 = vmatprep.subr.mxu0 0.0
        %1404 = vmatpush2.msra.mxu0 0.0
        %1405 = vmatprep.subr.mxu0 0.0
        %1406 = vmatpush2.msra.mxu0 0.0
        %1407 = vmatprep.subr.mxu0 0.0
        %1408 = vmatpush2.msra.mxu0 0.0
        %1409 = vmatprep.subr.mxu0 0.0
        %1410 = vmatpush2.msra.mxu0 0.0
        %1411 = vmatprep.subr.mxu0 0.0
        %1412 = vmatpush2.msra.mxu0 0.0
        %1413 = vmatprep.subr.mxu0 0.0
        %1414 = vmatpush2.msra.mxu0 0.0
        %1415 = vmatprep.subr.mxu0 0.0
        %1416 = vmatpush2.msra.mxu0 0.0
        %1417 = vmatprep.subr.mxu0 0.0
        %1418 = vmatpush2.msra.mxu0 0.0
        %1419 = vmatprep.mubr.f32.mxu0 0.0
        %1420 = vmatmul.mubr.f32.gmra.mxu0 %v1334
        %v1421 = vpop.f32.mrf.mxu0
        %v1422 = vadd.f32 0.0, %v1421
        %v1423 = vpop.f32.mrf.mxu0
        %v1424 = vadd.f32 0.0, %v1423
        %1425 = vmatprep.mubr.f32.mxu0 0.0
        %1426 = vmatmul.mubr.f32.gmra.mxu0 %v1337
        %v1427 = vpop.f32.mrf.mxu0
        %v1428 = vadd.f32 0.0, %v1427
        %v1429 = vpop.f32.mrf.mxu0
        %v1430 = vadd.f32 0.0, %v1429
        %1431 = vmatprep.mubr.f32.mxu0 0.0
        %1432 = vmatmul.mubr.f32.gmra.mxu0 %v1340
        %v1433 = vpop.f32.mrf.mxu0
        %v1434 = vadd.f32 0.0, %v1433
        %v1435 = vpop.f32.mrf.mxu0
        %v1436 = vadd.f32 0.0, %v1435
        %1437 = vmatprep.mubr.f32.mxu0 0.0
        %1438 = vmatmul.mubr.f32.gmra.mxu0 %v1343
        %v1439 = vpop.f32.mrf.mxu0
        %v1440 = vadd.f32 0.0, %v1439
        %v1441 = vpop.f32.mrf.mxu0
        %v1442 = vadd.f32 0.0, %v1441
        %1443 = vmatprep.mubr.f32.mxu0 0.0
        %1444 = vmatmul.mubr.f32.gmra.mxu0 %v1346
        %v1445 = vpop.f32.mrf.mxu0
        %v1446 = vadd.f32 0.0, %v1445
        %v1447 = vpop.f32.mrf.mxu0
        %v1448 = vadd.f32 0.0, %v1447
        %1449 = vmatprep.mubr.f32.mxu0 0.0
        %1450 = vmatmul.mubr.f32.gmra.mxu0 %v1349
        %v1451 = vpop.f32.mrf.mxu0
        %v1452 = vadd.f32 0.0, %v1451
        %v1453 = vpop.f32.mrf.mxu0
        %v1454 = vadd.f32 0.0, %v1453
        %1455 = vdwg.mxu0
        %v1456 = vadd.f32 %v1300, %v1422
        %v1457 = vadd.f32 %v1301, %v1424
        %v1458 = vadd.f32 %v1302, %v1428
        %v1459 = vadd.f32 %v1303, %v1430
        %v1460 = vadd.f32 %v1304, %v1434
        %v1461 = vadd.f32 %v1305, %v1436
        %v1462 = vadd.f32 %v1306, %v1440
        %v1463 = vadd.f32 %v1307, %v1442
        %v1464 = vadd.f32 %v1308, %v1446
        %v1465 = vadd.f32 %v1309, %v1448
        %v1466 = vadd.f32 %v1310, %v1452
        %v1467 = vadd.f32 %v1311, %v1454
        %v1468 = vld [vmem:[%s171] sm:$0x77]
        %v1469 = vld [vmem:[%s171 + $0x8] sm:$0x7]
        %v1472 = vcombine.high %v1468, %v1468
        %1473 = vrot.lane.b32.xlu0 %v1468, 79
        %v1474 = vpop.permute.xlu0 %1473
        %1475 = vrot.lane.b32.xlu0 %v1472, 79
        %v1476 = vpop.permute.xlu0 %1475
        %1477 = vrot.lane.b32.xlu0 %v1469, 79
        %v1478 = vpop.permute.xlu0 %1477
        %vm1479 = vcmask 646144
        %v1480 = vsel %vm1479, %v1474, %v1476
        %v1481 = vsel %vm1479, %v1476, %v1478
        %v1484 = vsel %vm508, %v1480, 0.0
        %v1485 = vsel %vm509, %v1481, 0.0
        %s1486 = scalar_lea.vmem %s176, 384
        %v1487 = vld [vmem:[%s1486] sm:$0xff]
        %v1488 = vld [vmem:[%s1486 + $0x8] sm:$0xff]
        %v1489 = vld [vmem:[%s1486 + $0x10] sm:$0xff]
        %v1490 = vld [vmem:[%s1486 + $0x18] sm:$0xff]
        %v1491 = vld [vmem:[%s1486 + $0x20] sm:$0xff]
        %v1492 = vld [vmem:[%s1486 + $0x28] sm:$0xff]
        %v1494 = vsel %vm254, %v1487, 0
        %v1497 = vsel %vm254, %v1488, 0
        %v1500 = vsel %vm254, %v1489, 0
        %v1503 = vsel %vm254, %v1490, 0
        %v1506 = vsel %vm254, %v1491, 0
        %v1509 = vsel %vm254, %v1492, 0
        %v1512 = vsel %vm273, %v1484, 0
        %v1515 = vsel %vm273, %v1485, 0
        %1517 = vmatprep.subr.mxu0 0.0
        %1518 = vmatpush1.msra.mxu0 0.0
        %1519 = vmatprep.subr.mxu0 0.0
        %1520 = vmatpush1.msra.mxu0 0.0
        %1521 = vmatprep.subr.mxu0 0.0
        %1522 = vmatpush1.msra.mxu0 0.0
        %1523 = vmatprep.subr.mxu0 0.0
        %1524 = vmatpush1.msra.mxu0 0.0
        %1525 = vmatprep.subr.mxu0 0.0
        %1526 = vmatpush1.msra.mxu0 0.0
        %1527 = vmatprep.subr.mxu0 0.0
        %1528 = vmatpush1.msra.mxu0 0.0
        %1529 = vmatprep.subr.mxu0 0.0
        %1530 = vmatpush1.msra.mxu0 0.0
        %1531 = vmatprep.subr.mxu0 0.0
        %1532 = vmatpush1.msra.mxu0 0.0
        %1533 = vmatprep.subr.mxu0 0.0
        %1534 = vmatpush1.msra.mxu0 0.0
        %1535 = vmatprep.subr.mxu0 0.0
        %1536 = vmatpush1.msra.mxu0 0.0
        %1537 = vmatprep.subr.mxu0 0.0
        %1538 = vmatpush1.msra.mxu0 0.0
        %1539 = vmatprep.subr.mxu0 0.0
        %1540 = vmatpush1.msra.mxu0 0.0
        %1541 = vmatprep.subr.mxu0 0.0
        %1542 = vmatpush1.msra.mxu0 0.0
        %1543 = vmatprep.subr.mxu0 0.0
        %1544 = vmatpush1.msra.mxu0 0.0
        %1545 = vmatprep.subr.mxu0 0.0
        %1546 = vmatpush1.msra.mxu0 0.0
        %1547 = vmatprep.subr.mxu0 %v1515
        %1548 = vmatpush1.msra.mxu0 %v1512
        %1549 = vmatprep.subr.mxu0 0.0
        %1550 = vmatpush2.msra.mxu0 0.0
        %1551 = vmatprep.subr.mxu0 0.0
        %1552 = vmatpush2.msra.mxu0 0.0
        %1553 = vmatprep.subr.mxu0 0.0
        %1554 = vmatpush2.msra.mxu0 0.0
        %1555 = vmatprep.subr.mxu0 0.0
        %1556 = vmatpush2.msra.mxu0 0.0
        %1557 = vmatprep.subr.mxu0 0.0
        %1558 = vmatpush2.msra.mxu0 0.0
        %1559 = vmatprep.subr.mxu0 0.0
        %1560 = vmatpush2.msra.mxu0 0.0
        %1561 = vmatprep.subr.mxu0 0.0
        %1562 = vmatpush2.msra.mxu0 0.0
        %1563 = vmatprep.subr.mxu0 0.0
        %1564 = vmatpush2.msra.mxu0 0.0
        %1565 = vmatprep.subr.mxu0 0.0
        %1566 = vmatpush2.msra.mxu0 0.0
        %1567 = vmatprep.subr.mxu0 0.0
        %1568 = vmatpush2.msra.mxu0 0.0
        %1569 = vmatprep.subr.mxu0 0.0
        %1570 = vmatpush2.msra.mxu0 0.0
        %1571 = vmatprep.subr.mxu0 0.0
        %1572 = vmatpush2.msra.mxu0 0.0
        %1573 = vmatprep.subr.mxu0 0.0
        %1574 = vmatpush2.msra.mxu0 0.0
        %1575 = vmatprep.subr.mxu0 0.0
        %1576 = vmatpush2.msra.mxu0 0.0
        %1577 = vmatprep.subr.mxu0 0.0
        %1578 = vmatpush2.msra.mxu0 0.0
        %1579 = vmatprep.subr.mxu0 0.0
        %1580 = vmatpush2.msra.mxu0 0.0
        %1581 = vmatprep.mubr.f32.mxu0 0.0
        %1582 = vmatmul.mubr.f32.gmra.mxu0 %v1494
        %v1583 = vpop.f32.mrf.mxu0
        %v1584 = vadd.f32 0.0, %v1583
        %v1585 = vpop.f32.mrf.mxu0
        %v1586 = vadd.f32 0.0, %v1585
        %1587 = vmatprep.mubr.f32.mxu0 0.0
        %1588 = vmatmul.mubr.f32.gmra.mxu0 %v1497
        %v1589 = vpop.f32.mrf.mxu0
        %v1590 = vadd.f32 0.0, %v1589
        %v1591 = vpop.f32.mrf.mxu0
        %v1592 = vadd.f32 0.0, %v1591
        %1593 = vmatprep.mubr.f32.mxu0 0.0
        %1594 = vmatmul.mubr.f32.gmra.mxu0 %v1500
        %v1595 = vpop.f32.mrf.mxu0
        %v1596 = vadd.f32 0.0, %v1595
        %v1597 = vpop.f32.mrf.mxu0
        %v1598 = vadd.f32 0.0, %v1597
        %1599 = vmatprep.mubr.f32.mxu0 0.0
        %1600 = vmatmul.mubr.f32.gmra.mxu0 %v1503
        %v1601 = vpop.f32.mrf.mxu0
        %v1602 = vadd.f32 0.0, %v1601
        %v1603 = vpop.f32.mrf.mxu0
        %v1604 = vadd.f32 0.0, %v1603
        %1605 = vmatprep.mubr.f32.mxu0 0.0
        %1606 = vmatmul.mubr.f32.gmra.mxu0 %v1506
        %v1607 = vpop.f32.mrf.mxu0
        %v1608 = vadd.f32 0.0, %v1607
        %v1609 = vpop.f32.mrf.mxu0
        %v1610 = vadd.f32 0.0, %v1609
        %1611 = vmatprep.mubr.f32.mxu0 0.0
        %1612 = vmatmul.mubr.f32.gmra.mxu0 %v1509
        %v1613 = vpop.f32.mrf.mxu0
        %v1614 = vadd.f32 0.0, %v1613
        %v1615 = vpop.f32.mrf.mxu0
        %v1616 = vadd.f32 0.0, %v1615
        %1617 = vdwg.mxu0
        %v1618 = vadd.f32 %v1456, %v1584
        %v1619 = vadd.f32 %v1457, %v1586
        %v1620 = vadd.f32 %v1458, %v1590
        %v1621 = vadd.f32 %v1459, %v1592
        %v1622 = vadd.f32 %v1460, %v1596
        %v1623 = vadd.f32 %v1461, %v1598
        %v1624 = vadd.f32 %v1462, %v1602
        %v1625 = vadd.f32 %v1463, %v1604
        %v1626 = vadd.f32 %v1464, %v1608
        %v1627 = vadd.f32 %v1465, %v1610
        %v1628 = vadd.f32 %v1466, %v1614
        %v1629 = vadd.f32 %v1467, %v1616
        %1630 = vst [vmem:[%s166] sm:$0xff] %v1618
        %1631 = vst [vmem:[%s166 + $0x8] sm:$0xff] %v1619
        %1632 = vst [vmem:[%s166 + $0x10] sm:$0xff] %v1620
        %1633 = vst [vmem:[%s166 + $0x18] sm:$0xff] %v1621
        %1634 = vst [vmem:[%s166 + $0x20] sm:$0xff] %v1622
        %1635 = vst [vmem:[%s166 + $0x28] sm:$0xff] %v1623
        %1636 = vst [vmem:[%s166 + $0x30] sm:$0xff] %v1624
        %1637 = vst [vmem:[%s166 + $0x38] sm:$0xff] %v1625
        %1638 = vst [vmem:[%s166 + $0x40] sm:$0xff] %v1626
        %1639 = vst [vmem:[%s166 + $0x48] sm:$0xff] %v1627
        %1640 = vst [vmem:[%s166 + $0x50] sm:$0xff] %v1628
        %1641 = vst [vmem:[%s166 + $0x58] sm:$0xff] %v1629
        %s1642 = sand.u32 %s90, 1
        %s1643 = scalar_lea.sflag [#allocation3], %s1642
        %s1644 = sand.u32 %s90, 1
        %s1645 = smul.addr %s1644, 96
        %s1646 = scalar_lea.vmem [#allocation2], %s1645
        // Predicated region
        $region29: #{tpu_custom_call.1} parent=27 // pred_check
          %p1647 = pneg %p100
        $region30: #{tpu_custom_call.1} parent=27 // pred_check_branch
          %1649 = sbr.rel (%p1647) target = $region32
        $region31: #{tpu_custom_call.1} parent=27 // pred_region
          %s1650 = smul.u32 6, %s21
          %s1652 = ssub.s32 1536, 1536
          %1653 = vsyncadd %s1643, %s1652
          %s1654 = smul.addr %s1650, 2
          %s1655 = smul.addr %s20, 12
          %s1656 = sadd.s32 %s1654, %s1655
          %s1657 = smul.addr %s1656, 128
          %s1658 = scalar_lea.hbm %s2, %s1657
          %s1659 = sshll.u32 %s1646, 4
          %s1660 = int_to_ptr.vmem [resolvable:$true] %s1659
          %1665 = dma.vmem_to_hbm [thread:$0]  %s1660, 1536, %s1658, %s1643, 256, 256, 16
        $region32: #{tpu_custom_call.1} parent=27 // pred_fallthru
          _
      $region28: #{tpu_custom_call.1} parent=5 // pred_fallthru
        _
      %p1666 = scmp.le.s32.totalorder 2, %s11
      // Predicated region
      $region33: #{tpu_custom_call.1} parent=5 // pred_check
        %p1667 = pneg %p1666
      $region34: #{tpu_custom_call.1} parent=5 // pred_check_branch
        %1669 = sbr.rel (%p1667) target = $region36
      $region35: #{tpu_custom_call.1} parent=5 // pred_region
        %s1670 = ssub.s32 %s11, 2
        // Predicated region
        $region37: #{tpu_custom_call.1} parent=35 // pred_check
          %p1671 = pneg %p106
        $region38: #{tpu_custom_call.1} parent=35 // pred_check_branch
          %1673 = sbr.rel (%p1671) target = $region40
        $region39: #{tpu_custom_call.1} parent=35 // pred_region
          %s1674 = sand.u32 %s91, 1
          %s1675 = scalar_lea.sflag [#allocation3], %s1674
          %s1676 = sand.u32 %s91, 1
          %s1677 = smul.addr %s1676, 96
          %s1678 = scalar_lea.vmem [#allocation2], %s1677
          %1679 = dma.done %s1675, 1536
        $region40: #{tpu_custom_call.1} parent=35 // pred_fallthru
          _
      $region36: #{tpu_custom_call.1} parent=5 // pred_fallthru
        _
    $region6: #{tpu_custom_call.1} parent=1 // loop_footer
      %s15 = sadd.s32 1, %s11
    $region7: #{tpu_custom_call.1} parent=1 // loop_footer_branch
      %10 = sbr.rel target = $region3
    $region8: #{tpu_custom_call.1} parent=1 // loop_exit
      _
    %1680 = vsyncpa [#allocation3], 1
    %s1681 = scalar_lea.sflag [#allocation3], 1
    %1682 = vsyncpa %s1681, 1

</llo_original>
